<compile_context>
chip_gen: v5e
topology: v5e:2x2
jax: 0.10.0
libtpu: 0.0.40
codegen_flags: <defaults>
</compile_context>

<pallas_src>
import math
import functools

import jax
import jax.numpy as jnp
from jax.experimental import pallas as pl
from jax.experimental.pallas import tpu as pltpu


def _decoder_layer_kernel(
    x_ref, mask_ref,
    wq_ref, bq_ref, wkv_ref, bkv_ref,
    wo_ref, bo_ref,
    g1_ref, be1_ref,
    w1_ref, bf1_ref, w2_ref, bf2_ref,
    g2_ref, be2_ref,
    out_ref,
    kv_ref,                       # VMEM scratch (S, 2*D) bf16: [K | V]
    *, num_heads, head_dim, eps, q_tile,
):
    i = pl.program_id(1)          # query-tile index (innermost, "arbitrary")

    # ---- K/V projection for the full sequence, once per batch element ----
    @pl.when(i == 0)
    def _():
        xf = x_ref[0].astype(jnp.bfloat16)                        # (S, D)
        kv_ref[...] = (
            jnp.dot(xf, wkv_ref[...], preferred_element_type=jnp.float32)
            + bkv_ref[...]
        ).astype(jnp.bfloat16)                                    # (S, 2D)

    # ---- query tile sliced out of the resident full-sequence x block ----
    row0 = pl.multiple_of(i * q_tile, q_tile)
    xq = x_ref[0, pl.ds(row0, q_tile), :]                         # (TQ, D) f32
    mask = mask_ref[...]                                          # (TQ, S) f32
    TQ, D = xq.shape

    # ---- Q projection (1/sqrt(head_dim) already folded into wq/bq) ----
    xq_b = xq.astype(jnp.bfloat16)
    q = (jnp.dot(xq_b, wq_ref[...], preferred_element_type=jnp.float32)
         + bq_ref[...])                                           # (TQ, D) f32

    # ---- per-head attention, head output fused into the output projection ----
    attn_out = jnp.zeros((TQ, D), jnp.float32)
    for h in range(num_heads):
        lo = h * head_dim
        hi = lo + head_dim
        qh = q[:, lo:hi].astype(jnp.bfloat16)                     # (TQ, hd)
        kh = kv_ref[:, lo:hi]                                     # (S, hd) bf16
        vh = kv_ref[:, D + lo:D + hi]                             # (S, hd) bf16

        # scores = q @ k^T (contract last dims; no explicit transpose)
        s = jax.lax.dot_general(
            qh, kh, (((1,), (1,)), ((), ())),
            preferred_element_type=jnp.float32) + mask            # (TQ, S) f32
        s = s - jnp.max(s, axis=-1, keepdims=True)
        e = jnp.exp(s)
        p = e * pl.reciprocal(jnp.sum(e, axis=-1, keepdims=True), approx=True)

        hv = jnp.dot(p.astype(jnp.bfloat16), vh,
                     preferred_element_type=jnp.float32)          # (TQ, hd)
        # concat-free: head h multiplies rows [lo:hi] of the output projection
        attn_out = attn_out + jnp.dot(
            hv.astype(jnp.bfloat16), wo_ref[lo:hi, :],
            preferred_element_type=jnp.float32)
    attn_out = attn_out + bo_ref[...]
    # dropout1 -> identity (eval mode)

    # ---- residual + LayerNormalization #1 (unbiased std, eps added to std) ----
    h1 = xq + attn_out
    mean1 = jnp.mean(h1, axis=-1, keepdims=True)
    d1 = h1 - mean1
    var1 = jnp.sum(d1 * d1, axis=-1, keepdims=True) * (1.0 / (D - 1))
    inv_std1 = pl.reciprocal(jnp.sqrt(var1) + eps, approx=True)
    y1 = g1_ref[...] * (d1 * inv_std1) + be1_ref[...]             # (TQ, D) f32

    # ---- position-wise FFN (ReLU; internal dropout = identity) ----
    f = (jnp.dot(y1.astype(jnp.bfloat16), w1_ref[...],
                 preferred_element_type=jnp.float32) + bf1_ref[...])
    f = jnp.maximum(f, 0.0)
    f2 = (jnp.dot(f.astype(jnp.bfloat16), w2_ref[...],
                  preferred_element_type=jnp.float32) + bf2_ref[...])
    # dropout2 -> identity (eval mode)

    # ---- residual + LayerNormalization #2 ----
    h2 = y1 + f2
    mean2 = jnp.mean(h2, axis=-1, keepdims=True)
    d2 = h2 - mean2
    var2 = jnp.sum(d2 * d2, axis=-1, keepdims=True) * (1.0 / (D - 1))
    inv_std2 = pl.reciprocal(jnp.sqrt(var2) + eps, approx=True)
    out_ref[0] = g2_ref[...] * (d2 * inv_std2) + be2_ref[...]


def decoder_layer(x, self_mask, kparams, *, num_heads, eps=1e-5, q_block=128):
    """x: (B, S, D) f32, self_mask: (S, S) f32 additive mask, kparams from prepare_params."""
    B, S, D = x.shape
    head_dim = D // num_heads
    F = kparams["w1"].shape[1]

    # Query-tile size: 128-row tiles when S divides evenly, else the full S
    # (block shape must be a multiple of 8 or equal the full dim).
    TQ = q_block if (S % q_block == 0) else S
    nq = S // TQ

    kernel = functools.partial(
        _decoder_layer_kernel,
        num_heads=num_heads, head_dim=head_dim, eps=eps, q_tile=TQ)

    def fixed(shape):
        zeros = tuple(0 for _ in shape)
        return pl.BlockSpec(shape, lambda b, i: zeros)

    in_specs = [
        pl.BlockSpec((1, S, D), lambda b, i: (b, 0, 0)),    # x (full seq, once per b)
        pl.BlockSpec((TQ, S), lambda b, i: (i, 0)),         # mask rows for tile
        fixed((D, D)), fixed((1, D)),                       # wq (bf16), bq
        fixed((D, 2 * D)), fixed((1, 2 * D)),               # wkv (bf16), bkv
        fixed((D, D)), fixed((1, D)),                       # wo (bf16), bo
        fixed((1, D)), fixed((1, D)),                       # gamma1, beta1
        fixed((D, F)), fixed((1, F)),                       # w1 (bf16), b1
        fixed((F, D)), fixed((1, D)),                       # w2 (bf16), b2
        fixed((1, D)), fixed((1, D)),                       # gamma2, beta2
    ]

    return pl.pallas_call(
        kernel,
        out_shape=jax.ShapeDtypeStruct((B, S, D), jnp.float32),
        grid_spec=pltpu.PrefetchScalarGridSpec(
            num_scalar_prefetch=0,
            grid=(B, nq),
            in_specs=in_specs,
            out_specs=pl.BlockSpec((1, TQ, D), lambda b, i: (b, i, 0)),
            scratch_shapes=[pltpu.VMEM((S, 2 * D), jnp.bfloat16)],
        ),
        compiler_params=pltpu.CompilerParams(
            # batch axis parallel (megacore), query-tile axis sequential
            # because the K/V scratch is carried across it.
            dimension_semantics=("parallel", "arbitrary"),
            vmem_limit_bytes=48 * 1024 * 1024),
    )(
        x, self_mask,
        kparams["wq"], kparams["bq"], kparams["wkv"], kparams["bkv"],
        kparams["wo"], kparams["bo"],
        kparams["gamma1"], kparams["beta1"],
        kparams["w1"], kparams["b1"], kparams["w2"], kparams["b2"],
        kparams["gamma2"], kparams["beta2"],
    )


def init_params(key, d_model, ffn_hidden):
    """PyTorch-equivalent parameters (f32, nn.Linear weights stored transposed [in, out])."""
    ks = jax.random.split(key, 6)
    scale = 0.05
    wqkv = scale * jax.random.normal(ks[0], (3 * d_model, d_model), jnp.float32)
    bqkv = scale * jax.random.normal(ks[1], (3 * d_model,), jnp.float32)
    wo = scale * jax.random.normal(ks[2], (d_model, d_model), jnp.float32)
    bo = scale * jax.random.normal(ks[3], (d_model,), jnp.float32)
    w1 = scale * jax.random.normal(ks[4], (ffn_hidden, d_model), jnp.float32)
    b1 = jnp.zeros((ffn_hidden,), jnp.float32)
    w2 = scale * jax.random.normal(ks[5], (d_model, ffn_hidden), jnp.float32)
    b2 = jnp.zeros((d_model,), jnp.float32)
    return {
        "wqkv_t": wqkv.T, "bqkv": bqkv.reshape(1, -1),
        "wo_t": wo.T, "bo": bo.reshape(1, -1),
        "gamma1": jnp.ones((1, d_model), jnp.float32),
        "beta1": jnp.zeros((1, d_model), jnp.float32),
        "w1_t": w1.T, "b1": b1.reshape(1, -1),
        "w2_t": w2.T, "b2": b2.reshape(1, -1),
        "gamma2": jnp.ones((1, d_model), jnp.float32),
        "beta2": jnp.zeros((1, d_model), jnp.float32),
    }


def prepare_params(params, *, num_heads):
    """Host-side transform into kernel layout:
       - regroup QKV output columns from per-head interleaved [q|k|v]
         (reshape(...,H,3*hd).chunk(3,-1) semantics) to [all-Q | all-K | all-V],
       - fold 1/sqrt(head_dim) into the Q projection,
       - cast matmul weights to bf16 (f32 accumulation happens in the MXU),
       - keep biases / LayerNorm params in f32."""
    wqkv_t = params["wqkv_t"]                 # (D, 3D)
    bqkv = params["bqkv"]                     # (1, 3D)
    D = wqkv_t.shape[0]
    head_dim = D // num_heads

    perm = []
    for which in range(3):                    # 0:q, 1:k, 2:v
        for h in range(num_heads):
            base = h * 3 * head_dim + which * head_dim
            perm.extend(range(base, base + head_dim))
    perm = jnp.asarray(perm, jnp.int32)
    w = wqkv_t[:, perm]
    b = bqkv[:, perm]

    inv_sqrt_dk = 1.0 / math.sqrt(head_dim)
    wq = w[:, :D] * inv_sqrt_dk
    bq = b[:, :D] * inv_sqrt_dk
    wkv = w[:, D:]
    bkv = b[:, D:]

    return {
        "wq": wq.astype(jnp.bfloat16), "bq": bq,
        "wkv": wkv.astype(jnp.bfloat16), "bkv": bkv,
        "wo": params["wo_t"].astype(jnp.bfloat16), "bo": params["bo"],
        "gamma1": params["gamma1"], "beta1": params["beta1"],
        "w1": params["w1_t"].astype(jnp.bfloat16), "b1": params["b1"],
        "w2": params["w2_t"].astype(jnp.bfloat16), "b2": params["b2"],
        "gamma2": params["gamma2"], "beta2": params["beta2"],
    }


def decoder_layer_ref(x, mask, params, *, num_heads, eps=1e-5):
    """Pure-JAX reference mirroring the PyTorch module exactly (f32 weights)."""
    B, S, D = x.shape
    hd = D // num_heads
    qkv = x @ params["wqkv_t"] + params["bqkv"]                    # (B,S,3D)
    qkv = qkv.reshape(B, S, num_heads, 3 * hd).transpose(0, 2, 1, 3)
    q, k, v = qkv[..., :hd], qkv[..., hd:2 * hd], qkv[..., 2 * hd:]
    s = jnp.einsum("bhqd,bhkd->bhqk", q, k) / math.sqrt(hd) + mask
    p = jax.nn.softmax(s, axis=-1)
    vals = jnp.einsum("bhqk,bhkd->bhqd", p, v)
    vals = vals.transpose(0, 2, 1, 3).reshape(B, S, D)
    attn = vals @ params["wo_t"] + params["bo"]

    def ln(h, g, b):
        mean = jnp.mean(h, axis=-1, keepdims=True)
        std = jnp.std(h, axis=-1, keepdims=True, ddof=1) + eps     # PyTorch unbiased std
        return g * (h - mean) / std + b

    y1 = ln(x + attn, params["gamma1"], params["beta1"])
    f = jnp.maximum(y1 @ params["w1_t"] + params["b1"], 0.0)
    f2 = f @ params["w2_t"] + params["b2"]
    return ln(y1 + f2, params["gamma2"], params["beta2"])


if __name__ == "__main__":
    # Small but lane-dense config: D=128 (one full lane tile), FFN=2*D.
    B, S, D, H, FFN = 2, 8, 128, 4, 256
    key = jax.random.PRNGKey(0)
    kx, kp = jax.random.split(key)
    x = jax.random.normal(kx, (B, S, D), jnp.float32)

    # causal additive mask (0 on/below diagonal, large negative above)
    neg = jnp.full((S, S), -1e9, jnp.float32)
    self_mask = jnp.where(jnp.tril(jnp.ones((S, S), jnp.bool_)), 0.0, neg)

    params = init_params(kp, D, FFN)
    kparams = prepare_params(params, num_heads=H)

    out = decoder_layer(x, self_mask, kparams, num_heads=H)
    out = jax.block_until_ready(out)
    assert out.shape == (B, S, D)
    assert bool(jnp.all(jnp.isfinite(out)))

    # Loose correctness check vs f32 reference (kernel uses bf16 weights +
    # approx reciprocal, so allow a generous absolute tolerance).
    ref = decoder_layer_ref(x, self_mask, params, num_heads=H)
    max_err = float(jnp.max(jnp.abs(out - ref)))
    assert max_err < 0.2, f"max abs err vs reference: {max_err}"

    print("KERNEL_OK")
</pallas_src>

<mosaic_0001>
module attributes {stable_mosaic.version = 11 : i64} {
  func.func @_decoder_layer_kernel(%arg0: i32, %arg1: i32, %arg2: memref<1x8x128xf32, #tpu.memory_space<vmem>>, %arg3: memref<8x8xf32, #tpu.memory_space<vmem>>, %arg4: memref<128x128xbf16, #tpu.memory_space<vmem>>, %arg5: memref<1x128xf32, #tpu.memory_space<vmem>>, %arg6: memref<128x256xbf16, #tpu.memory_space<vmem>>, %arg7: memref<1x256xf32, #tpu.memory_space<vmem>>, %arg8: memref<128x128xbf16, #tpu.memory_space<vmem>>, %arg9: memref<1x128xf32, #tpu.memory_space<vmem>>, %arg10: memref<1x128xf32, #tpu.memory_space<vmem>>, %arg11: memref<1x128xf32, #tpu.memory_space<vmem>>, %arg12: memref<128x256xbf16, #tpu.memory_space<vmem>>, %arg13: memref<1x256xf32, #tpu.memory_space<vmem>>, %arg14: memref<256x128xbf16, #tpu.memory_space<vmem>>, %arg15: memref<1x128xf32, #tpu.memory_space<vmem>>, %arg16: memref<1x128xf32, #tpu.memory_space<vmem>>, %arg17: memref<1x128xf32, #tpu.memory_space<vmem>>, %arg18: memref<1x8x128xf32, #tpu.memory_space<vmem>>, %arg19: memref<8x256xbf16, #tpu.memory_space<vmem>>) attributes {dimension_semantics = [#tpu.dimension_semantics<parallel>, #tpu.dimension_semantics<arbitrary>], iteration_bounds = array<i64: 2, 1>, scalar_prefetch = 0 : i64, scratch_operands = 1 : i64, tpu.core_type = #tpu.core_type<tc>, window_params = [{transform_indices = @transform_0, window_bounds = array<i64: 1, 8, 128>}, {transform_indices = @transform_1, window_bounds = array<i64: 8, 8>}, {pipeline_mode = #tpu.pipeline_mode<synchronous>, transform_indices = @transform_2, window_bounds = array<i64: 128, 128>}, {pipeline_mode = #tpu.pipeline_mode<synchronous>, transform_indices = @transform_3, window_bounds = array<i64: 1, 128>}, {pipeline_mode = #tpu.pipeline_mode<synchronous>, transform_indices = @transform_4, window_bounds = array<i64: 128, 256>}, {pipeline_mode = #tpu.pipeline_mode<synchronous>, transform_indices = @transform_5, window_bounds = array<i64: 1, 256>}, {pipeline_mode = #tpu.pipeline_mode<synchronous>, transform_indices = @transform_6, window_bounds = array<i64: 128, 128>}, {pipeline_mode = #tpu.pipeline_mode<synchronous>, transform_indices = @transform_7, window_bounds = array<i64: 1, 128>}, {pipeline_mode = #tpu.pipeline_mode<synchronous>, transform_indices = @transform_8, window_bounds = array<i64: 1, 128>}, {pipeline_mode = #tpu.pipeline_mode<synchronous>, transform_indices = @transform_9, window_bounds = array<i64: 1, 128>}, {pipeline_mode = #tpu.pipeline_mode<synchronous>, transform_indices = @transform_10, window_bounds = array<i64: 128, 256>}, {pipeline_mode = #tpu.pipeline_mode<synchronous>, transform_indices = @transform_11, window_bounds = array<i64: 1, 256>}, {pipeline_mode = #tpu.pipeline_mode<synchronous>, transform_indices = @transform_12, window_bounds = array<i64: 256, 128>}, {pipeline_mode = #tpu.pipeline_mode<synchronous>, transform_indices = @transform_13, window_bounds = array<i64: 1, 128>}, {pipeline_mode = #tpu.pipeline_mode<synchronous>, transform_indices = @transform_14, window_bounds = array<i64: 1, 128>}, {pipeline_mode = #tpu.pipeline_mode<synchronous>, transform_indices = @transform_15, window_bounds = array<i64: 1, 128>}, {transform_indices = @transform_16, window_bounds = array<i64: 1, 8, 128>}]} {
    %c0_i32 = arith.constant 0 : i32
    %0 = arith.cmpi eq, %arg1, %c0_i32 : i32
    %1 = arith.extui %0 : i1 to i32
    %c0_i32_0 = arith.constant 0 : i32
    %2 = arith.cmpi ne, %1, %c0_i32_0 : i32
    scf.if %2 {
      %c0_80 = arith.constant 0 : index
      %c0_81 = arith.constant 0 : index
      %c0_82 = arith.constant 0 : index
      %172 = vector.load %arg2[%c0_80, %c0_81, %c0_82] : memref<1x8x128xf32, #tpu.memory_space<vmem>>, vector<1x8x128xf32>
      %173 = vector.shape_cast %172 : vector<1x8x128xf32> to vector<8x128xf32>
      %174 = arith.truncf %173 : vector<8x128xf32> to vector<8x128xbf16>
      %c0_83 = arith.constant 0 : index
      %c0_84 = arith.constant 0 : index
      %175 = vector.load %arg6[%c0_83, %c0_84] : memref<128x256xbf16, #tpu.memory_space<vmem>>, vector<128x256xbf16>
      %cst_85 = arith.constant dense<0.000000e+00> : vector<8x256xf32>
      %176 = tpu.matmul %174, %175, %cst_85 {dimension_numbers = #tpu.dot_dimension_numbers<[1], [0], [0], [1], [0, 0, 1, 1], [], []>} : vector<8x128xbf16>, vector<128x256xbf16>, vector<8x256xf32> -> vector<8x256xf32>
      %c0_86 = arith.constant 0 : index
      %c0_87 = arith.constant 0 : index
      %177 = vector.load %arg7[%c0_86, %c0_87] : memref<1x256xf32, #tpu.memory_space<vmem>>, vector<1x256xf32>
      %178 = vector.broadcast %177 : vector<1x256xf32> to vector<8x256xf32>
      %179 = arith.addf %176, %178 : vector<8x256xf32>
      %180 = arith.truncf %179 : vector<8x256xf32> to vector<8x256xbf16>
      %c0_88 = arith.constant 0 : index
      %c0_89 = arith.constant 0 : index
      %181 = vector.load %arg19[%c0_88, %c0_89] : memref<8x256xbf16, #tpu.memory_space<vmem>>, vector<8x256xbf16>
      tpu.vector_store %arg19[%c0_88, %c0_89], %180 {strides = array<i32>} : memref<8x256xbf16, #tpu.memory_space<vmem>>, vector<8x256xbf16>,
    } else {
    }
    %c8_i32 = arith.constant 8 : i32
    %3 = arith.muli %arg1, %c8_i32 : i32
    %4 = tpu.assume_multiple %3, 8 : i32
    %c0 = arith.constant 0 : index
    %5 = arith.index_cast %4 : i32 to index
    %c0_1 = arith.constant 0 : index
    %6 = vector.load %arg2[%c0, %5, %c0_1] : memref<1x8x128xf32, #tpu.memory_space<vmem>>, vector<1x8x128xf32>
    %7 = vector.shape_cast %6 : vector<1x8x128xf32> to vector<8x128xf32>
    %c0_2 = arith.constant 0 : index
    %c0_3 = arith.constant 0 : index
    %8 = vector.load %arg3[%c0_2, %c0_3] : memref<8x8xf32, #tpu.memory_space<vmem>>, vector<8x8xf32>
    %9 = arith.truncf %7 : vector<8x128xf32> to vector<8x128xbf16>
    %c0_4 = arith.constant 0 : index
    %c0_5 = arith.constant 0 : index
    %10 = vector.load %arg4[%c0_4, %c0_5] : memref<128x128xbf16, #tpu.memory_space<vmem>>, vector<128x128xbf16>
    %cst = arith.constant dense<0.000000e+00> : vector<8x128xf32>
    %11 = tpu.matmul %9, %10, %cst {dimension_numbers = #tpu.dot_dimension_numbers<[1], [0], [0], [1], [0, 0, 1, 1], [], []>} : vector<8x128xbf16>, vector<128x128xbf16>, vector<8x128xf32> -> vector<8x128xf32>
    %c0_6 = arith.constant 0 : index
    %c0_7 = arith.constant 0 : index
    %12 = vector.load %arg5[%c0_6, %c0_7] : memref<1x128xf32, #tpu.memory_space<vmem>>, vector<1x128xf32>
    %13 = vector.broadcast %12 : vector<1x128xf32> to vector<8x128xf32>
    %14 = arith.addf %11, %13 : vector<8x128xf32>
    %cst_8 = arith.constant 0.000000e+00 : f32
    %15 = vector.broadcast %cst_8 : f32 to vector<8x128xf32>
    %16 = vector.extract_strided_slice %14 {offsets = [0, 0], sizes = [8, 32], strides = [1, 1]} : vector<8x128xf32> to vector<8x32xf32>
    %17 = arith.truncf %16 : vector<8x32xf32> to vector<8x32xbf16>
    %c0_9 = arith.constant 0 : index
    %c0_10 = arith.constant 0 : index
    %18 = vector.load %arg19[%c0_9, %c0_10] : memref<8x256xbf16, #tpu.memory_space<vmem>>, vector<8x32xbf16>
    %c0_11 = arith.constant 0 : index
    %c128 = arith.constant 128 : index
    %19 = vector.load %arg19[%c0_11, %c128] : memref<8x256xbf16, #tpu.memory_space<vmem>>, vector<8x32xbf16>
    %cst_12 = arith.constant dense<0.000000e+00> : vector<8x8xf32>
    %20 = tpu.matmul %17, %18, %cst_12 {dimension_numbers = #tpu.dot_dimension_numbers<[1], [1], [0], [0], [0, 0, 1, 0], [], []>} : vector<8x32xbf16>, vector<8x32xbf16>, vector<8x8xf32> -> vector<8x8xf32>
    %21 = arith.addf %20, %8 : vector<8x8xf32>
    %cst_13 = arith.constant dense<0xFF800000> : vector<8xf32>
    %22 = vector.multi_reduction <maximumf>, %21, %cst_13 [1] : vector<8x8xf32> to vector<8xf32>
    %23 = vector.shape_cast %22 : vector<8xf32> to vector<8x1xf32>
    %24 = vector.broadcast %23 : vector<8x1xf32> to vector<8x8xf32>
    %25 = arith.subf %21, %24 : vector<8x8xf32>
    %26 = math.exp %25 : vector<8x8xf32>
    %cst_14 = arith.constant dense<0.000000e+00> : vector<8xf32>
    %27 = vector.multi_reduction <add>, %26, %cst_14 [1] : vector<8x8xf32> to vector<8xf32>
    %28 = vector.shape_cast %27 : vector<8xf32> to vector<8x1xf32>
    %29 = tpu.reciprocal %28 {approx = true} : vector<8x1xf32> -> vector<8x1xf32>
    %30 = vector.broadcast %29 : vector<8x1xf32> to vector<8x8xf32>
    %31 = arith.mulf %26, %30 : vector<8x8xf32>
    %32 = arith.truncf %31 : vector<8x8xf32> to vector<8x8xbf16>
    %cst_15 = arith.constant dense<0.000000e+00> : vector<8x32xf32>
    %33 = tpu.matmul %32, %19, %cst_15 {dimension_numbers = #tpu.dot_dimension_numbers<[1], [0], [0], [1], [0, 0, 1, 1], [], []>} : vector<8x8xbf16>, vector<8x32xbf16>, vector<8x32xf32> -> vector<8x32xf32>
    %34 = arith.truncf %33 : vector<8x32xf32> to vector<8x32xbf16>
    %c0_16 = arith.constant 0 : index
    %c0_17 = arith.constant 0 : index
    %35 = vector.load %arg8[%c0_16, %c0_17] : memref<128x128xbf16, #tpu.memory_space<vmem>>, vector<32x128xbf16>
    %cst_18 = arith.constant dense<0.000000e+00> : vector<8x128xf32>
    %36 = tpu.matmul %34, %35, %cst_18 {dimension_numbers = #tpu.dot_dimension_numbers<[1], [0], [0], [1], [0, 0, 1, 1], [], []>} : vector<8x32xbf16>, vector<32x128xbf16>, vector<8x128xf32> -> vector<8x128xf32>
    %37 = arith.addf %15, %36 : vector<8x128xf32>
    %38 = vector.extract_strided_slice %14 {offsets = [0, 32], sizes = [8, 32], strides = [1, 1]} : vector<8x128xf32> to vector<8x32xf32>
    %39 = arith.truncf %38 : vector<8x32xf32> to vector<8x32xbf16>
    %c0_19 = arith.constant 0 : index
    %c32 = arith.constant 32 : index
    %40 = vector.load %arg19[%c0_19, %c32] : memref<8x256xbf16, #tpu.memory_space<vmem>>, vector<8x32xbf16>
    %c0_20 = arith.constant 0 : index
    %c160 = arith.constant 160 : index
    %41 = vector.load %arg19[%c0_20, %c160] : memref<8x256xbf16, #tpu.memory_space<vmem>>, vector<8x32xbf16>
    %cst_21 = arith.constant dense<0.000000e+00> : vector<8x8xf32>
    %42 = tpu.matmul %39, %40, %cst_21 {dimension_numbers = #tpu.dot_dimension_numbers<[1], [1], [0], [0], [0, 0, 1, 0], [], []>} : vector<8x32xbf16>, vector<8x32xbf16>, vector<8x8xf32> -> vector<8x8xf32>
    %43 = arith.addf %42, %8 : vector<8x8xf32>
    %cst_22 = arith.constant dense<0xFF800000> : vector<8xf32>
    %44 = vector.multi_reduction <maximumf>, %43, %cst_22 [1] : vector<8x8xf32> to vector<8xf32>
    %45 = vector.shape_cast %44 : vector<8xf32> to vector<8x1xf32>
    %46 = vector.broadcast %45 : vector<8x1xf32> to vector<8x8xf32>
    %47 = arith.subf %43, %46 : vector<8x8xf32>
    %48 = math.exp %47 : vector<8x8xf32>
    %cst_23 = arith.constant dense<0.000000e+00> : vector<8xf32>
    %49 = vector.multi_reduction <add>, %48, %cst_23 [1] : vector<8x8xf32> to vector<8xf32>
    %50 = vector.shape_cast %49 : vector<8xf32> to vector<8x1xf32>
    %51 = tpu.reciprocal %50 {approx = true} : vector<8x1xf32> -> vector<8x1xf32>
    %52 = vector.broadcast %51 : vector<8x1xf32> to vector<8x8xf32>
    %53 = arith.mulf %48, %52 : vector<8x8xf32>
    %54 = arith.truncf %53 : vector<8x8xf32> to vector<8x8xbf16>
    %cst_24 = arith.constant dense<0.000000e+00> : vector<8x32xf32>
    %55 = tpu.matmul %54, %41, %cst_24 {dimension_numbers = #tpu.dot_dimension_numbers<[1], [0], [0], [1], [0, 0, 1, 1], [], []>} : vector<8x8xbf16>, vector<8x32xbf16>, vector<8x32xf32> -> vector<8x32xf32>
    %56 = arith.truncf %55 : vector<8x32xf32> to vector<8x32xbf16>
    %c32_25 = arith.constant 32 : index
    %c0_26 = arith.constant 0 : index
    %57 = vector.load %arg8[%c32_25, %c0_26] : memref<128x128xbf16, #tpu.memory_space<vmem>>, vector<32x128xbf16>
    %cst_27 = arith.constant dense<0.000000e+00> : vector<8x128xf32>
    %58 = tpu.matmul %56, %57, %cst_27 {dimension_numbers = #tpu.dot_dimension_numbers<[1], [0], [0], [1], [0, 0, 1, 1], [], []>} : vector<8x32xbf16>, vector<32x128xbf16>, vector<8x128xf32> -> vector<8x128xf32>
    %59 = arith.addf %37, %58 : vector<8x128xf32>
    %60 = vector.extract_strided_slice %14 {offsets = [0, 64], sizes = [8, 32], strides = [1, 1]} : vector<8x128xf32> to vector<8x32xf32>
    %61 = arith.truncf %60 : vector<8x32xf32> to vector<8x32xbf16>
    %c0_28 = arith.constant 0 : index
    %c64 = arith.constant 64 : index
    %62 = vector.load %arg19[%c0_28, %c64] : memref<8x256xbf16, #tpu.memory_space<vmem>>, vector<8x32xbf16>
    %c0_29 = arith.constant 0 : index
    %c192 = arith.constant 192 : index
    %63 = vector.load %arg19[%c0_29, %c192] : memref<8x256xbf16, #tpu.memory_space<vmem>>, vector<8x32xbf16>
    %cst_30 = arith.constant dense<0.000000e+00> : vector<8x8xf32>
    %64 = tpu.matmul %61, %62, %cst_30 {dimension_numbers = #tpu.dot_dimension_numbers<[1], [1], [0], [0], [0, 0, 1, 0], [], []>} : vector<8x32xbf16>, vector<8x32xbf16>, vector<8x8xf32> -> vector<8x8xf32>
    %65 = arith.addf %64, %8 : vector<8x8xf32>
    %cst_31 = arith.constant dense<0xFF800000> : vector<8xf32>
    %66 = vector.multi_reduction <maximumf>, %65, %cst_31 [1] : vector<8x8xf32> to vector<8xf32>
    %67 = vector.shape_cast %66 : vector<8xf32> to vector<8x1xf32>
    %68 = vector.broadcast %67 : vector<8x1xf32> to vector<8x8xf32>
    %69 = arith.subf %65, %68 : vector<8x8xf32>
    %70 = math.exp %69 : vector<8x8xf32>
    %cst_32 = arith.constant dense<0.000000e+00> : vector<8xf32>
    %71 = vector.multi_reduction <add>, %70, %cst_32 [1] : vector<8x8xf32> to vector<8xf32>
    %72 = vector.shape_cast %71 : vector<8xf32> to vector<8x1xf32>
    %73 = tpu.reciprocal %72 {approx = true} : vector<8x1xf32> -> vector<8x1xf32>
    %74 = vector.broadcast %73 : vector<8x1xf32> to vector<8x8xf32>
    %75 = arith.mulf %70, %74 : vector<8x8xf32>
    %76 = arith.truncf %75 : vector<8x8xf32> to vector<8x8xbf16>
    %cst_33 = arith.constant dense<0.000000e+00> : vector<8x32xf32>
    %77 = tpu.matmul %76, %63, %cst_33 {dimension_numbers = #tpu.dot_dimension_numbers<[1], [0], [0], [1], [0, 0, 1, 1], [], []>} : vector<8x8xbf16>, vector<8x32xbf16>, vector<8x32xf32> -> vector<8x32xf32>
    %78 = arith.truncf %77 : vector<8x32xf32> to vector<8x32xbf16>
    %c64_34 = arith.constant 64 : index
    %c0_35 = arith.constant 0 : index
    %79 = vector.load %arg8[%c64_34, %c0_35] : memref<128x128xbf16, #tpu.memory_space<vmem>>, vector<32x128xbf16>
    %cst_36 = arith.constant dense<0.000000e+00> : vector<8x128xf32>
    %80 = tpu.matmul %78, %79, %cst_36 {dimension_numbers = #tpu.dot_dimension_numbers<[1], [0], [0], [1], [0, 0, 1, 1], [], []>} : vector<8x32xbf16>, vector<32x128xbf16>, vector<8x128xf32> -> vector<8x128xf32>
    %81 = arith.addf %59, %80 : vector<8x128xf32>
    %82 = vector.extract_strided_slice %14 {offsets = [0, 96], sizes = [8, 32], strides = [1, 1]} : vector<8x128xf32> to vector<8x32xf32>
    %83 = arith.truncf %82 : vector<8x32xf32> to vector<8x32xbf16>
    %c0_37 = arith.constant 0 : index
    %c96 = arith.constant 96 : index
    %84 = vector.load %arg19[%c0_37, %c96] : memref<8x256xbf16, #tpu.memory_space<vmem>>, vector<8x32xbf16>
    %c0_38 = arith.constant 0 : index
    %c224 = arith.constant 224 : index
    %85 = vector.load %arg19[%c0_38, %c224] : memref<8x256xbf16, #tpu.memory_space<vmem>>, vector<8x32xbf16>
    %cst_39 = arith.constant dense<0.000000e+00> : vector<8x8xf32>
    %86 = tpu.matmul %83, %84, %cst_39 {dimension_numbers = #tpu.dot_dimension_numbers<[1], [1], [0], [0], [0, 0, 1, 0], [], []>} : vector<8x32xbf16>, vector<8x32xbf16>, vector<8x8xf32> -> vector<8x8xf32>
    %87 = arith.addf %86, %8 : vector<8x8xf32>
    %cst_40 = arith.constant dense<0xFF800000> : vector<8xf32>
    %88 = vector.multi_reduction <maximumf>, %87, %cst_40 [1] : vector<8x8xf32> to vector<8xf32>
    %89 = vector.shape_cast %88 : vector<8xf32> to vector<8x1xf32>
    %90 = vector.broadcast %89 : vector<8x1xf32> to vector<8x8xf32>
    %91 = arith.subf %87, %90 : vector<8x8xf32>
    %92 = math.exp %91 : vector<8x8xf32>
    %cst_41 = arith.constant dense<0.000000e+00> : vector<8xf32>
    %93 = vector.multi_reduction <add>, %92, %cst_41 [1] : vector<8x8xf32> to vector<8xf32>
    %94 = vector.shape_cast %93 : vector<8xf32> to vector<8x1xf32>
    %95 = tpu.reciprocal %94 {approx = true} : vector<8x1xf32> -> vector<8x1xf32>
    %96 = vector.broadcast %95 : vector<8x1xf32> to vector<8x8xf32>
    %97 = arith.mulf %92, %96 : vector<8x8xf32>
    %98 = arith.truncf %97 : vector<8x8xf32> to vector<8x8xbf16>
    %cst_42 = arith.constant dense<0.000000e+00> : vector<8x32xf32>
    %99 = tpu.matmul %98, %85, %cst_42 {dimension_numbers = #tpu.dot_dimension_numbers<[1], [0], [0], [1], [0, 0, 1, 1], [], []>} : vector<8x8xbf16>, vector<8x32xbf16>, vector<8x32xf32> -> vector<8x32xf32>
    %100 = arith.truncf %99 : vector<8x32xf32> to vector<8x32xbf16>
    %c96_43 = arith.constant 96 : index
    %c0_44 = arith.constant 0 : index
    %101 = vector.load %arg8[%c96_43, %c0_44] : memref<128x128xbf16, #tpu.memory_space<vmem>>, vector<32x128xbf16>
    %cst_45 = arith.constant dense<0.000000e+00> : vector<8x128xf32>
    %102 = tpu.matmul %100, %101, %cst_45 {dimension_numbers = #tpu.dot_dimension_numbers<[1], [0], [0], [1], [0, 0, 1, 1], [], []>} : vector<8x32xbf16>, vector<32x128xbf16>, vector<8x128xf32> -> vector<8x128xf32>
    %103 = arith.addf %81, %102 : vector<8x128xf32>
    %c0_46 = arith.constant 0 : index
    %c0_47 = arith.constant 0 : index
    %104 = vector.load %arg9[%c0_46, %c0_47] : memref<1x128xf32, #tpu.memory_space<vmem>>, vector<1x128xf32>
    %105 = vector.broadcast %104 : vector<1x128xf32> to vector<8x128xf32>
    %106 = arith.addf %103, %105 : vector<8x128xf32>
    %107 = arith.addf %7, %106 : vector<8x128xf32>
    %cst_48 = arith.constant dense<0.000000e+00> : vector<8xf32>
    %108 = vector.multi_reduction <add>, %107, %cst_48 [1] : vector<8x128xf32> to vector<8xf32>
    %109 = vector.shape_cast %108 : vector<8xf32> to vector<8x1xf32>
    %cst_49 = arith.constant 1.280000e+02 : f32
    %110 = vector.broadcast %cst_49 : f32 to vector<8x1xf32>
    %111 = arith.divf %109, %110 : vector<8x1xf32>
    %112 = vector.broadcast %111 : vector<8x1xf32> to vector<8x128xf32>
    %113 = arith.subf %107, %112 : vector<8x128xf32>
    %114 = arith.mulf %113, %113 : vector<8x128xf32>
    %cst_50 = arith.constant dense<0.000000e+00> : vector<8xf32>
    %115 = vector.multi_reduction <add>, %114, %cst_50 [1] : vector<8x128xf32> to vector<8xf32>
    %116 = vector.shape_cast %115 : vector<8xf32> to vector<8x1xf32>
    %cst_51 = arith.constant 0.00787401571 : f32
    %117 = vector.broadcast %cst_51 : f32 to vector<8x1xf32>
    %118 = arith.mulf %116, %117 : vector<8x1xf32>
    %119 = math.sqrt %118 : vector<8x1xf32>
    %cst_52 = arith.constant 9.99999974E-6 : f32
    %120 = vector.broadcast %cst_52 : f32 to vector<8x1xf32>
    %121 = arith.addf %119, %120 : vector<8x1xf32>
    %122 = tpu.reciprocal %121 {approx = true} : vector<8x1xf32> -> vector<8x1xf32>
    %c0_53 = arith.constant 0 : index
    %c0_54 = arith.constant 0 : index
    %123 = vector.load %arg10[%c0_53, %c0_54] : memref<1x128xf32, #tpu.memory_space<vmem>>, vector<1x128xf32>
    %124 = vector.broadcast %122 : vector<8x1xf32> to vector<8x128xf32>
    %125 = arith.mulf %113, %124 : vector<8x128xf32>
    %126 = vector.broadcast %123 : vector<1x128xf32> to vector<8x128xf32>
    %127 = arith.mulf %126, %125 : vector<8x128xf32>
    %c0_55 = arith.constant 0 : index
    %c0_56 = arith.constant 0 : index
    %128 = vector.load %arg11[%c0_55, %c0_56] : memref<1x128xf32, #tpu.memory_space<vmem>>, vector<1x128xf32>
    %129 = vector.broadcast %128 : vector<1x128xf32> to vector<8x128xf32>
    %130 = arith.addf %127, %129 : vector<8x128xf32>
    %131 = arith.truncf %130 : vector<8x128xf32> to vector<8x128xbf16>
    %c0_57 = arith.constant 0 : index
    %c0_58 = arith.constant 0 : index
    %132 = vector.load %arg12[%c0_57, %c0_58] : memref<128x256xbf16, #tpu.memory_space<vmem>>, vector<128x256xbf16>
    %cst_59 = arith.constant dense<0.000000e+00> : vector<8x256xf32>
    %133 = tpu.matmul %131, %132, %cst_59 {dimension_numbers = #tpu.dot_dimension_numbers<[1], [0], [0], [1], [0, 0, 1, 1], [], []>} : vector<8x128xbf16>, vector<128x256xbf16>, vector<8x256xf32> -> vector<8x256xf32>
    %c0_60 = arith.constant 0 : index
    %c0_61 = arith.constant 0 : index
    %134 = vector.load %arg13[%c0_60, %c0_61] : memref<1x256xf32, #tpu.memory_space<vmem>>, vector<1x256xf32>
    %135 = vector.broadcast %134 : vector<1x256xf32> to vector<8x256xf32>
    %136 = arith.addf %133, %135 : vector<8x256xf32>
    %cst_62 = arith.constant 0.000000e+00 : f32
    %137 = vector.broadcast %cst_62 : f32 to vector<8x256xf32>
    %138 = arith.maximumf %136, %137 : vector<8x256xf32>
    %139 = arith.truncf %138 : vector<8x256xf32> to vector<8x256xbf16>
    %c0_63 = arith.constant 0 : index
    %c0_64 = arith.constant 0 : index
    %140 = vector.load %arg14[%c0_63, %c0_64] : memref<256x128xbf16, #tpu.memory_space<vmem>>, vector<256x128xbf16>
    %cst_65 = arith.constant dense<0.000000e+00> : vector<8x128xf32>
    %141 = tpu.matmul %139, %140, %cst_65 {dimension_numbers = #tpu.dot_dimension_numbers<[1], [0], [0], [1], [0, 0, 1, 1], [], []>} : vector<8x256xbf16>, vector<256x128xbf16>, vector<8x128xf32> -> vector<8x128xf32>
    %c0_66 = arith.constant 0 : index
    %c0_67 = arith.constant 0 : index
    %142 = vector.load %arg15[%c0_66, %c0_67] : memref<1x128xf32, #tpu.memory_space<vmem>>, vector<1x128xf32>
    %143 = vector.broadcast %142 : vector<1x128xf32> to vector<8x128xf32>
    %144 = arith.addf %141, %143 : vector<8x128xf32>
    %145 = arith.addf %130, %144 : vector<8x128xf32>
    %cst_68 = arith.constant dense<0.000000e+00> : vector<8xf32>
    %146 = vector.multi_reduction <add>, %145, %cst_68 [1] : vector<8x128xf32> to vector<8xf32>
    %147 = vector.shape_cast %146 : vector<8xf32> to vector<8x1xf32>
    %cst_69 = arith.constant 1.280000e+02 : f32
    %148 = vector.broadcast %cst_69 : f32 to vector<8x1xf32>
    %149 = arith.divf %147, %148 : vector<8x1xf32>
    %150 = vector.broadcast %149 : vector<8x1xf32> to vector<8x128xf32>
    %151 = arith.subf %145, %150 : vector<8x128xf32>
    %152 = arith.mulf %151, %151 : vector<8x128xf32>
    %cst_70 = arith.constant dense<0.000000e+00> : vector<8xf32>
    %153 = vector.multi_reduction <add>, %152, %cst_70 [1] : vector<8x128xf32> to vector<8xf32>
    %154 = vector.shape_cast %153 : vector<8xf32> to vector<8x1xf32>
    %cst_71 = arith.constant 0.00787401571 : f32
    %155 = vector.broadcast %cst_71 : f32 to vector<8x1xf32>
    %156 = arith.mulf %154, %155 : vector<8x1xf32>
    %157 = math.sqrt %156 : vector<8x1xf32>
    %cst_72 = arith.constant 9.99999974E-6 : f32
    %158 = vector.broadcast %cst_72 : f32 to vector<8x1xf32>
    %159 = arith.addf %157, %158 : vector<8x1xf32>
    %160 = tpu.reciprocal %159 {approx = true} : vector<8x1xf32> -> vector<8x1xf32>
    %c0_73 = arith.constant 0 : index
    %c0_74 = arith.constant 0 : index
    %161 = vector.load %arg16[%c0_73, %c0_74] : memref<1x128xf32, #tpu.memory_space<vmem>>, vector<1x128xf32>
    %162 = vector.broadcast %160 : vector<8x1xf32> to vector<8x128xf32>
    %163 = arith.mulf %151, %162 : vector<8x128xf32>
    %164 = vector.broadcast %161 : vector<1x128xf32> to vector<8x128xf32>
    %165 = arith.mulf %164, %163 : vector<8x128xf32>
    %c0_75 = arith.constant 0 : index
    %c0_76 = arith.constant 0 : index
    %166 = vector.load %arg17[%c0_75, %c0_76] : memref<1x128xf32, #tpu.memory_space<vmem>>, vector<1x128xf32>
    %167 = vector.broadcast %166 : vector<1x128xf32> to vector<8x128xf32>
    %168 = arith.addf %165, %167 : vector<8x128xf32>
    %c0_77 = arith.constant 0 : index
    %c0_78 = arith.constant 0 : index
    %c0_79 = arith.constant 0 : index
    %169 = vector.load %arg18[%c0_77, %c0_78, %c0_79] : memref<1x8x128xf32, #tpu.memory_space<vmem>>, vector<1x8x128xf32>
    %170 = vector.shape_cast %169 : vector<1x8x128xf32> to vector<8x128xf32>
    %171 = vector.shape_cast %168 : vector<8x128xf32> to vector<1x8x128xf32>
    tpu.vector_store %arg18[%c0_77, %c0_78, %c0_79], %171 {strides = array<i32>} : memref<1x8x128xf32, #tpu.memory_space<vmem>>, vector<1x8x128xf32>,
    return
  }
  func.func @transform_0(%arg0: i32, %arg1: i32) -> (i32, i32, i32) {
    %c0_i32 = arith.constant 0 : i32
    %c0_i32_0 = arith.constant 0 : i32
    %c0_i32_1 = arith.constant 0 : i32
    return %arg0, %c0_i32, %c0_i32_0 : i32, i32, i32
  }
  func.func @transform_1(%arg0: i32, %arg1: i32) -> (i32, i32) {
    %c0_i32 = arith.constant 0 : i32
    %c0_i32_0 = arith.constant 0 : i32
    return %arg1, %c0_i32 : i32, i32
  }
  func.func @transform_2(%arg0: i32, %arg1: i32) -> (i32, i32) {
    %c0_i32 = arith.constant 0 : i32
    %c0_i32_0 = arith.constant 0 : i32
    %c0_i32_1 = arith.constant 0 : i32
    return %c0_i32, %c0_i32_0 : i32, i32
  }
  func.func @transform_3(%arg0: i32, %arg1: i32) -> (i32, i32) {
    %c0_i32 = arith.constant 0 : i32
    %c0_i32_0 = arith.constant 0 : i32
    %c0_i32_1 = arith.constant 0 : i32
    return %c0_i32, %c0_i32_0 : i32, i32
  }
  func.func @transform_4(%arg0: i32, %arg1: i32) -> (i32, i32) {
    %c0_i32 = arith.constant 0 : i32
    %c0_i32_0 = arith.constant 0 : i32
    %c0_i32_1 = arith.constant 0 : i32
    return %c0_i32, %c0_i32_0 : i32, i32
  }
  func.func @transform_5(%arg0: i32, %arg1: i32) -> (i32, i32) {
    %c0_i32 = arith.constant 0 : i32
    %c0_i32_0 = arith.constant 0 : i32
    %c0_i32_1 = arith.constant 0 : i32
    return %c0_i32, %c0_i32_0 : i32, i32
  }
  func.func @transform_6(%arg0: i32, %arg1: i32) -> (i32, i32) {
    %c0_i32 = arith.constant 0 : i32
    %c0_i32_0 = arith.constant 0 : i32
    %c0_i32_1 = arith.constant 0 : i32
    return %c0_i32, %c0_i32_0 : i32, i32
  }
  func.func @transform_7(%arg0: i32, %arg1: i32) -> (i32, i32) {
    %c0_i32 = arith.constant 0 : i32
    %c0_i32_0 = arith.constant 0 : i32
    %c0_i32_1 = arith.constant 0 : i32
    return %c0_i32, %c0_i32_0 : i32, i32
  }
  func.func @transform_8(%arg0: i32, %arg1: i32) -> (i32, i32) {
    %c0_i32 = arith.constant 0 : i32
    %c0_i32_0 = arith.constant 0 : i32
    %c0_i32_1 = arith.constant 0 : i32
    return %c0_i32, %c0_i32_0 : i32, i32
  }
  func.func @transform_9(%arg0: i32, %arg1: i32) -> (i32, i32) {
    %c0_i32 = arith.constant 0 : i32
    %c0_i32_0 = arith.constant 0 : i32
    %c0_i32_1 = arith.constant 0 : i32
    return %c0_i32, %c0_i32_0 : i32, i32
  }
  func.func @transform_10(%arg0: i32, %arg1: i32) -> (i32, i32) {
    %c0_i32 = arith.constant 0 : i32
    %c0_i32_0 = arith.constant 0 : i32
    %c0_i32_1 = arith.constant 0 : i32
    return %c0_i32, %c0_i32_0 : i32, i32
  }
  func.func @transform_11(%arg0: i32, %arg1: i32) -> (i32, i32) {
    %c0_i32 = arith.constant 0 : i32
    %c0_i32_0 = arith.constant 0 : i32
    %c0_i32_1 = arith.constant 0 : i32
    return %c0_i32, %c0_i32_0 : i32, i32
  }
  func.func @transform_12(%arg0: i32, %arg1: i32) -> (i32, i32) {
    %c0_i32 = arith.constant 0 : i32
    %c0_i32_0 = arith.constant 0 : i32
    %c0_i32_1 = arith.constant 0 : i32
    return %c0_i32, %c0_i32_0 : i32, i32
  }
  func.func @transform_13(%arg0: i32, %arg1: i32) -> (i32, i32) {
    %c0_i32 = arith.constant 0 : i32
    %c0_i32_0 = arith.constant 0 : i32
    %c0_i32_1 = arith.constant 0 : i32
    return %c0_i32, %c0_i32_0 : i32, i32
  }
  func.func @transform_14(%arg0: i32, %arg1: i32) -> (i32, i32) {
    %c0_i32 = arith.constant 0 : i32
    %c0_i32_0 = arith.constant 0 : i32
    %c0_i32_1 = arith.constant 0 : i32
    return %c0_i32, %c0_i32_0 : i32, i32
  }
  func.func @transform_15(%arg0: i32, %arg1: i32) -> (i32, i32) {
    %c0_i32 = arith.constant 0 : i32
    %c0_i32_0 = arith.constant 0 : i32
    %c0_i32_1 = arith.constant 0 : i32
    return %c0_i32, %c0_i32_0 : i32, i32
  }
  func.func @transform_16(%arg0: i32, %arg1: i32) -> (i32, i32, i32) {
    %c0_i32 = arith.constant 0 : i32
    %c0_i32_0 = arith.constant 0 : i32
    return %arg0, %arg1, %c0_i32 : i32, i32, i32
  }
}

</mosaic_0001>

<llo_original>
// kernel: tpu_custom_call.1
$region0: #{tpu_custom_call.1}
  #allocation0 [shape = 'u32[]', space=smem, size = 0x4, offset = 0x4, fixed_abs, tag = 'smem constant byte address 0x4 - core index']
  #allocation1 [shape = 'u32[72,128]{1,0:T(1,128)}', space=vmem, size = 0x9000, scoped, tag = 'internal scratch']
  #allocation2 [shape = 'bf16[8,256]{1,0:T(8,128)(2,1)}', space=vmem, size = 0x1000, scoped, tag = 'scratch operand']
  %s0 = inlined_call_operand.hbm [shape: f32[2,8,128], index: 0, kind: input, shape index: {}]
  %s1 = inlined_call_operand.hbm [shape: f32[8,8], index: 1, kind: input, shape index: {}]
  %s2 = inlined_call_operand.hbm [shape: bf16[128,128], index: 2, kind: input, shape index: {}]
  %s3 = inlined_call_operand.hbm [shape: f32[1,128], index: 3, kind: input, shape index: {}]
  %s4 = inlined_call_operand.hbm [shape: bf16[128,256], index: 4, kind: input, shape index: {}]
  %s5 = inlined_call_operand.vmem [shape: f32[1,256], index: 5, kind: input, shape index: {}]
  %s6 = inlined_call_operand.hbm [shape: bf16[128,128], index: 6, kind: input, shape index: {}]
  %s7 = inlined_call_operand.vmem [shape: f32[1,128], index: 7, kind: input, shape index: {}]
  %s8 = inlined_call_operand.vmem [shape: f32[1,128], index: 8, kind: input, shape index: {}]
  %s9 = inlined_call_operand.vmem [shape: f32[1,128], index: 9, kind: input, shape index: {}]
  %s10 = inlined_call_operand.hbm [shape: bf16[128,256], index: 10, kind: input, shape index: {}]
  %s11 = inlined_call_operand.vmem [shape: f32[1,256], index: 11, kind: input, shape index: {}]
  %s12 = inlined_call_operand.hbm [shape: bf16[256,128], index: 12, kind: input, shape index: {}]
  %s13 = inlined_call_operand.vmem [shape: f32[1,128], index: 13, kind: input, shape index: {}]
  %s14 = inlined_call_operand.vmem [shape: f32[1,128], index: 14, kind: input, shape index: {}]
  %s15 = inlined_call_operand.vmem [shape: f32[1,128], index: 15, kind: input, shape index: {}]
  %s16 = inlined_call_operand.hbm [shape: f32[2,8,128], index: 16, kind: output, shape index: {}]
  %s17 = sld [smem:[#allocation0]]
  $region133: #{tpu_custom_call.1} parent=0
    _
  %s19 = ssub.s32 1, %s17
  %s20 = scalar_select 0, %s19, %s17
  $region1: #{tpu_custom_call.1} parent=0
    #allocation3 [shape = 'u8[8192]{0}', space=vmem, size = 0x2000, scoped, tag = 'input window, operand 0']
    #allocation4 [shape = 's32[2]{0}', space=sflag, size = 0x8, scoped, tag = 'scoped memory for tpu_custom_call.1']
    #allocation5 [shape = 's32[2]{0}', space=sflag, size = 0x8, scoped, tag = 'scoped memory for tpu_custom_call.1']
    #allocation6 [shape = 'u8[4096]{0}', space=vmem, size = 0x1000, scoped, tag = 'input window, operand 1, single buffered']
    #allocation7 [shape = 's32[1]{0}', space=sflag, size = 0x4, scoped, tag = 'scoped memory for tpu_custom_call.1']
    #allocation8 [shape = 'u8[32768]{0}', space=vmem, size = 0x8000, scoped, tag = 'input window, operand 2, single buffered']
    #allocation9 [shape = 'u8[512]{0}', space=vmem, size = 0x400, scoped, tag = 'input window, operand 3, single buffered']
    #allocation10 [shape = 's32[1]{0}', space=sflag, size = 0x4, scoped, tag = 'scoped memory for tpu_custom_call.1']
    #allocation11 [shape = 'u8[65536]{0}', space=vmem, size = 0x10000, scoped, tag = 'input window, operand 4, single buffered']
    #allocation12 [shape = 'u8[32768]{0}', space=vmem, size = 0x8000, scoped, tag = 'input window, operand 6, single buffered']
    #allocation13 [shape = 's32[1]{0}', space=sflag, size = 0x4, scoped, tag = 'scoped memory for tpu_custom_call.1']
    #allocation14 [shape = 'u8[65536]{0}', space=vmem, size = 0x10000, scoped, tag = 'input window, operand 10, single buffered']
    #allocation15 [shape = 'u8[65536]{0}', space=vmem, size = 0x10000, scoped, tag = 'input window, operand 12, single buffered']
    #allocation16 [shape = 's32[1]{0}', space=sflag, size = 0x4, scoped, tag = 'scoped memory for tpu_custom_call.1']
    #allocation17 [shape = 'u8[8192]{0}', space=vmem, size = 0x2000, scoped, tag = 'output window, operand 0']
    %21 = vsyncpa [#allocation4], 0
    %s22 = scalar_lea.sflag [#allocation4], 1
    %23 = vsyncpa %s22, 0
    %24 = vsyncpa [#allocation7], 0
    %25 = vsyncpa [#allocation10], 0
    %26 = vsyncpa [#allocation13], 0
    %27 = vsyncpa [#allocation16], 0
    %28 = vsyncpa [#allocation5], 0
    %s29 = scalar_lea.sflag [#allocation5], 1
    %30 = vsyncpa %s29, 0
    loop: start=0, step=1, limit=4
    $region2: #{tpu_custom_call.1} parent=1 // loop_pre_header
      _
    $region3: #{tpu_custom_call.1} parent=1 // loop_header
      %s32 = sphi 0, %s36
      %p33 = scmp.ge.s32.totalorder %s32, 4
      %s39 = sphi 0, %s51
      %s40 = sphi 0, %s47
      %s41 = sphi 0, %s39
      %s42 = sphi 0, %s40
      %s43 = sphi 0, %s41
      %s44 = sphi 0, %s42
      %s54 = sphi 0, %s56
      %s57 = sphi 0, %s54
      %s58 = sphi 0, %s57
      %s74 = sphi 0, %s58
      %s80 = sphi 0, %s82
      %s83 = sphi 0, %s80
      %s84 = sphi 0, %s83
      %s100 = sphi 0, %s84
      %s104 = sphi 0, %s104
      %s106 = sphi 0, %s104
      %s107 = sphi 0, %s106
      %s121 = sphi 0, %s107
      %s125 = sphi 0, %s125
      %s127 = sphi 0, %s125
      %s128 = sphi 0, %s127
      %s142 = sphi 0, %s128
      %s146 = sphi 0, %s146
      %s148 = sphi 0, %s146
      %s149 = sphi 0, %s148
      %s163 = sphi 0, %s149
      %s167 = sphi 0, %s167
      %s169 = sphi 0, %s167
      %s170 = sphi 0, %s169
      %s184 = sphi 0, %s170
      %s188 = sphi 0, %s188
      %s190 = sphi 0, %s188
      %s191 = sphi 0, %s190
      %s205 = sphi 0, %s191
      %s209 = sphi 0, %s209
      %s211 = sphi 0, %s209
      %s212 = sphi 0, %s211
      %s226 = sphi 0, %s212
      %s230 = sphi 0, %s230
      %s232 = sphi 0, %s230
      %s233 = sphi 0, %s232
      %s247 = sphi 0, %s233
      %s251 = sphi 0, %s251
      %s253 = sphi 0, %s251
      %s254 = sphi 0, %s253
      %s268 = sphi 0, %s254
      %s272 = sphi 0, %s272
      %s274 = sphi 0, %s272
      %s275 = sphi 0, %s274
      %s289 = sphi 0, %s275
      %s293 = sphi 0, %s293
      %s295 = sphi 0, %s293
      %s296 = sphi 0, %s295
      %s310 = sphi 0, %s296
      %s314 = sphi 0, %s314
      %s316 = sphi 0, %s314
      %s317 = sphi 0, %s316
      %s331 = sphi 0, %s317
      %s335 = sphi 0, %s335
      %s337 = sphi 0, %s335
      %s338 = sphi 0, %s337
      %s352 = sphi 0, %s338
      %s356 = sphi 0, %s356
      %s358 = sphi 0, %s356
      %s359 = sphi 0, %s358
      %s373 = sphi 0, %s359
      %s377 = sphi 0, %s377
      %s379 = sphi 0, %s377
      %s380 = sphi 0, %s379
      %s394 = sphi 0, %s380
      %s402 = sphi 0, %s404
      %s405 = sphi 0, %s402
      %s406 = sphi 0, %s405
      %s422 = sphi 0, %s406
    $region4: #{tpu_custom_call.1} parent=1 // loop_header_branch
      %35 = sbr.rel (%p33) target = $region8
    $region5: #{tpu_custom_call.1} parent=1 // loop_body
      %s37 = ssub.s32 %s32, 1
      %s38 = ssub.s32 %s32, 2
      %s45 = sadd.s32 1, %s40
      %p46 = scmp.ge.s32.totalorder %s45, 1
      %s47 = scalar_select %p46, 0, %s45
      %s48 = sadd.s32 1, %s39
      %s49 = scalar_select %p46, %s48, %s39
      %p50 = scmp.ge.s32.totalorder %s49, 2
      %s51 = scalar_select %p50, 0, %s49
      %s52 = ssub.s32 %s39, %s51
      %p53 = scmp.eq.s32.totalorder %s52, 0
      %s55 = sadd.s32 %s54, 1
      %s56 = scalar_select %p53, %s54, %s55
      %p59 = pneg %p53
      %p60 = scmp.eq.s32.totalorder %s32, 1
      %p61 = por %p59, %p60
      %p62 = scmp.ne.s32.totalorder %s54, %s57
      %p63 = scmp.eq.s32.totalorder %s32, 0
      %p64 = por %p62, %p63
      %p65 = scmp.ne.s32.totalorder %s54, %s57
      %p66 = scmp.eq.s32.totalorder %s37, 1
      %p67 = por %p65, %p66
      %p68 = scmp.ne.s32.totalorder %s57, %s58
      %p69 = scmp.eq.s32.totalorder %s37, 0
      %p70 = por %p68, %p69
      %p71 = scmp.ne.s32.totalorder %s57, %s58
      %p72 = scmp.eq.s32.totalorder %s38, 1
      %p73 = por %p71, %p72
      %p75 = scmp.ne.s32.totalorder %s58, %s74
      %p76 = scmp.eq.s32.totalorder %s38, 0
      %p77 = por %p75, %p76
      %s78 = ssub.s32 %s40, %s47
      %p79 = scmp.eq.s32.totalorder %s78, 0
      %s81 = sadd.s32 %s80, 1
      %s82 = scalar_select %p79, %s80, %s81
      %p85 = pneg %p79
      %p86 = scmp.eq.s32.totalorder %s32, 1
      %p87 = por %p85, %p86
      %p88 = scmp.ne.s32.totalorder %s80, %s83
      %p89 = scmp.eq.s32.totalorder %s32, 0
      %p90 = por %p88, %p89
      %p91 = scmp.ne.s32.totalorder %s80, %s83
      %p92 = scmp.eq.s32.totalorder %s37, 1
      %p93 = por %p91, %p92
      %p94 = scmp.ne.s32.totalorder %s83, %s84
      %p95 = scmp.eq.s32.totalorder %s37, 0
      %p96 = por %p94, %p95
      %p97 = scmp.ne.s32.totalorder %s83, %s84
      %p98 = scmp.eq.s32.totalorder %s38, 1
      %p99 = por %p97, %p98
      %p101 = scmp.ne.s32.totalorder %s84, %s100
      %p102 = scmp.eq.s32.totalorder %s38, 0
      %p103 = por %p101, %p102
      %s105 = sadd.s32 %s104, 1
      %p108 = scmp.eq.s32.totalorder %s32, 1
      %p109 = scmp.ne.s32.totalorder %s104, %s106
      %p110 = scmp.eq.s32.totalorder %s32, 0
      %p111 = por %p109, %p110
      %p112 = scmp.ne.s32.totalorder %s104, %s106
      %p113 = scmp.eq.s32.totalorder %s37, 1
      %p114 = por %p112, %p113
      %p115 = scmp.ne.s32.totalorder %s106, %s107
      %p116 = scmp.eq.s32.totalorder %s37, 0
      %p117 = por %p115, %p116
      %p118 = scmp.ne.s32.totalorder %s106, %s107
      %p119 = scmp.eq.s32.totalorder %s38, 1
      %p120 = por %p118, %p119
      %p122 = scmp.ne.s32.totalorder %s107, %s121
      %p123 = scmp.eq.s32.totalorder %s38, 0
      %p124 = por %p122, %p123
      %s126 = sadd.s32 %s125, 1
      %p129 = scmp.eq.s32.totalorder %s32, 1
      %p130 = scmp.ne.s32.totalorder %s125, %s127
      %p131 = scmp.eq.s32.totalorder %s32, 0
      %p132 = por %p130, %p131
      %p133 = scmp.ne.s32.totalorder %s125, %s127
      %p134 = scmp.eq.s32.totalorder %s37, 1
      %p135 = por %p133, %p134
      %p136 = scmp.ne.s32.totalorder %s127, %s128
      %p137 = scmp.eq.s32.totalorder %s37, 0
      %p138 = por %p136, %p137
      %p139 = scmp.ne.s32.totalorder %s127, %s128
      %p140 = scmp.eq.s32.totalorder %s38, 1
      %p141 = por %p139, %p140
      %p143 = scmp.ne.s32.totalorder %s128, %s142
      %p144 = scmp.eq.s32.totalorder %s38, 0
      %p145 = por %p143, %p144
      %s147 = sadd.s32 %s146, 1
      %p150 = scmp.eq.s32.totalorder %s32, 1
      %p151 = scmp.ne.s32.totalorder %s146, %s148
      %p152 = scmp.eq.s32.totalorder %s32, 0
      %p153 = por %p151, %p152
      %p154 = scmp.ne.s32.totalorder %s146, %s148
      %p155 = scmp.eq.s32.totalorder %s37, 1
      %p156 = por %p154, %p155
      %p157 = scmp.ne.s32.totalorder %s148, %s149
      %p158 = scmp.eq.s32.totalorder %s37, 0
      %p159 = por %p157, %p158
      %p160 = scmp.ne.s32.totalorder %s148, %s149
      %p161 = scmp.eq.s32.totalorder %s38, 1
      %p162 = por %p160, %p161
      %p164 = scmp.ne.s32.totalorder %s149, %s163
      %p165 = scmp.eq.s32.totalorder %s38, 0
      %p166 = por %p164, %p165
      %s168 = sadd.s32 %s167, 1
      %p171 = scmp.eq.s32.totalorder %s32, 1
      %p172 = scmp.ne.s32.totalorder %s167, %s169
      %p173 = scmp.eq.s32.totalorder %s32, 0
      %p174 = por %p172, %p173
      %p175 = scmp.ne.s32.totalorder %s167, %s169
      %p176 = scmp.eq.s32.totalorder %s37, 1
      %p177 = por %p175, %p176
      %p178 = scmp.ne.s32.totalorder %s169, %s170
      %p179 = scmp.eq.s32.totalorder %s37, 0
      %p180 = por %p178, %p179
      %p181 = scmp.ne.s32.totalorder %s169, %s170
      %p182 = scmp.eq.s32.totalorder %s38, 1
      %p183 = por %p181, %p182
      %p185 = scmp.ne.s32.totalorder %s170, %s184
      %p186 = scmp.eq.s32.totalorder %s38, 0
      %p187 = por %p185, %p186
      %s189 = sadd.s32 %s188, 1
      %p192 = scmp.eq.s32.totalorder %s32, 1
      %p193 = scmp.ne.s32.totalorder %s188, %s190
      %p194 = scmp.eq.s32.totalorder %s32, 0
      %p195 = por %p193, %p194
      %p196 = scmp.ne.s32.totalorder %s188, %s190
      %p197 = scmp.eq.s32.totalorder %s37, 1
      %p198 = por %p196, %p197
      %p199 = scmp.ne.s32.totalorder %s190, %s191
      %p200 = scmp.eq.s32.totalorder %s37, 0
      %p201 = por %p199, %p200
      %p202 = scmp.ne.s32.totalorder %s190, %s191
      %p203 = scmp.eq.s32.totalorder %s38, 1
      %p204 = por %p202, %p203
      %p206 = scmp.ne.s32.totalorder %s191, %s205
      %p207 = scmp.eq.s32.totalorder %s38, 0
      %p208 = por %p206, %p207
      %s210 = sadd.s32 %s209, 1
      %p213 = scmp.eq.s32.totalorder %s32, 1
      %p214 = scmp.ne.s32.totalorder %s209, %s211
      %p215 = scmp.eq.s32.totalorder %s32, 0
      %p216 = por %p214, %p215
      %p217 = scmp.ne.s32.totalorder %s209, %s211
      %p218 = scmp.eq.s32.totalorder %s37, 1
      %p219 = por %p217, %p218
      %p220 = scmp.ne.s32.totalorder %s211, %s212
      %p221 = scmp.eq.s32.totalorder %s37, 0
      %p222 = por %p220, %p221
      %p223 = scmp.ne.s32.totalorder %s211, %s212
      %p224 = scmp.eq.s32.totalorder %s38, 1
      %p225 = por %p223, %p224
      %p227 = scmp.ne.s32.totalorder %s212, %s226
      %p228 = scmp.eq.s32.totalorder %s38, 0
      %p229 = por %p227, %p228
      %s231 = sadd.s32 %s230, 1
      %p234 = scmp.eq.s32.totalorder %s32, 1
      %p235 = scmp.ne.s32.totalorder %s230, %s232
      %p236 = scmp.eq.s32.totalorder %s32, 0
      %p237 = por %p235, %p236
      %p238 = scmp.ne.s32.totalorder %s230, %s232
      %p239 = scmp.eq.s32.totalorder %s37, 1
      %p240 = por %p238, %p239
      %p241 = scmp.ne.s32.totalorder %s232, %s233
      %p242 = scmp.eq.s32.totalorder %s37, 0
      %p243 = por %p241, %p242
      %p244 = scmp.ne.s32.totalorder %s232, %s233
      %p245 = scmp.eq.s32.totalorder %s38, 1
      %p246 = por %p244, %p245
      %p248 = scmp.ne.s32.totalorder %s233, %s247
      %p249 = scmp.eq.s32.totalorder %s38, 0
      %p250 = por %p248, %p249
      %s252 = sadd.s32 %s251, 1
      %p255 = scmp.eq.s32.totalorder %s32, 1
      %p256 = scmp.ne.s32.totalorder %s251, %s253
      %p257 = scmp.eq.s32.totalorder %s32, 0
      %p258 = por %p256, %p257
      %p259 = scmp.ne.s32.totalorder %s251, %s253
      %p260 = scmp.eq.s32.totalorder %s37, 1
      %p261 = por %p259, %p260
      %p262 = scmp.ne.s32.totalorder %s253, %s254
      %p263 = scmp.eq.s32.totalorder %s37, 0
      %p264 = por %p262, %p263
      %p265 = scmp.ne.s32.totalorder %s253, %s254
      %p266 = scmp.eq.s32.totalorder %s38, 1
      %p267 = por %p265, %p266
      %p269 = scmp.ne.s32.totalorder %s254, %s268
      %p270 = scmp.eq.s32.totalorder %s38, 0
      %p271 = por %p269, %p270
      %s273 = sadd.s32 %s272, 1
      %p276 = scmp.eq.s32.totalorder %s32, 1
      %p277 = scmp.ne.s32.totalorder %s272, %s274
      %p278 = scmp.eq.s32.totalorder %s32, 0
      %p279 = por %p277, %p278
      %p280 = scmp.ne.s32.totalorder %s272, %s274
      %p281 = scmp.eq.s32.totalorder %s37, 1
      %p282 = por %p280, %p281
      %p283 = scmp.ne.s32.totalorder %s274, %s275
      %p284 = scmp.eq.s32.totalorder %s37, 0
      %p285 = por %p283, %p284
      %p286 = scmp.ne.s32.totalorder %s274, %s275
      %p287 = scmp.eq.s32.totalorder %s38, 1
      %p288 = por %p286, %p287
      %p290 = scmp.ne.s32.totalorder %s275, %s289
      %p291 = scmp.eq.s32.totalorder %s38, 0
      %p292 = por %p290, %p291
      %s294 = sadd.s32 %s293, 1
      %p297 = scmp.eq.s32.totalorder %s32, 1
      %p298 = scmp.ne.s32.totalorder %s293, %s295
      %p299 = scmp.eq.s32.totalorder %s32, 0
      %p300 = por %p298, %p299
      %p301 = scmp.ne.s32.totalorder %s293, %s295
      %p302 = scmp.eq.s32.totalorder %s37, 1
      %p303 = por %p301, %p302
      %p304 = scmp.ne.s32.totalorder %s295, %s296
      %p305 = scmp.eq.s32.totalorder %s37, 0
      %p306 = por %p304, %p305
      %p307 = scmp.ne.s32.totalorder %s295, %s296
      %p308 = scmp.eq.s32.totalorder %s38, 1
      %p309 = por %p307, %p308
      %p311 = scmp.ne.s32.totalorder %s296, %s310
      %p312 = scmp.eq.s32.totalorder %s38, 0
      %p313 = por %p311, %p312
      %s315 = sadd.s32 %s314, 1
      %p318 = scmp.eq.s32.totalorder %s32, 1
      %p319 = scmp.ne.s32.totalorder %s314, %s316
      %p320 = scmp.eq.s32.totalorder %s32, 0
      %p321 = por %p319, %p320
      %p322 = scmp.ne.s32.totalorder %s314, %s316
      %p323 = scmp.eq.s32.totalorder %s37, 1
      %p324 = por %p322, %p323
      %p325 = scmp.ne.s32.totalorder %s316, %s317
      %p326 = scmp.eq.s32.totalorder %s37, 0
      %p327 = por %p325, %p326
      %p328 = scmp.ne.s32.totalorder %s316, %s317
      %p329 = scmp.eq.s32.totalorder %s38, 1
      %p330 = por %p328, %p329
      %p332 = scmp.ne.s32.totalorder %s317, %s331
      %p333 = scmp.eq.s32.totalorder %s38, 0
      %p334 = por %p332, %p333
      %s336 = sadd.s32 %s335, 1
      %p339 = scmp.eq.s32.totalorder %s32, 1
      %p340 = scmp.ne.s32.totalorder %s335, %s337
      %p341 = scmp.eq.s32.totalorder %s32, 0
      %p342 = por %p340, %p341
      %p343 = scmp.ne.s32.totalorder %s335, %s337
      %p344 = scmp.eq.s32.totalorder %s37, 1
      %p345 = por %p343, %p344
      %p346 = scmp.ne.s32.totalorder %s337, %s338
      %p347 = scmp.eq.s32.totalorder %s37, 0
      %p348 = por %p346, %p347
      %p349 = scmp.ne.s32.totalorder %s337, %s338
      %p350 = scmp.eq.s32.totalorder %s38, 1
      %p351 = por %p349, %p350
      %p353 = scmp.ne.s32.totalorder %s338, %s352
      %p354 = scmp.eq.s32.totalorder %s38, 0
      %p355 = por %p353, %p354
      %s357 = sadd.s32 %s356, 1
      %p360 = scmp.eq.s32.totalorder %s32, 1
      %p361 = scmp.ne.s32.totalorder %s356, %s358
      %p362 = scmp.eq.s32.totalorder %s32, 0
      %p363 = por %p361, %p362
      %p364 = scmp.ne.s32.totalorder %s356, %s358
      %p365 = scmp.eq.s32.totalorder %s37, 1
      %p366 = por %p364, %p365
      %p367 = scmp.ne.s32.totalorder %s358, %s359
      %p368 = scmp.eq.s32.totalorder %s37, 0
      %p369 = por %p367, %p368
      %p370 = scmp.ne.s32.totalorder %s358, %s359
      %p371 = scmp.eq.s32.totalorder %s38, 1
      %p372 = por %p370, %p371
      %p374 = scmp.ne.s32.totalorder %s359, %s373
      %p375 = scmp.eq.s32.totalorder %s38, 0
      %p376 = por %p374, %p375
      %s378 = sadd.s32 %s377, 1
      %p381 = scmp.eq.s32.totalorder %s32, 1
      %p382 = scmp.ne.s32.totalorder %s377, %s379
      %p383 = scmp.eq.s32.totalorder %s32, 0
      %p384 = por %p382, %p383
      %p385 = scmp.ne.s32.totalorder %s377, %s379
      %p386 = scmp.eq.s32.totalorder %s37, 1
      %p387 = por %p385, %p386
      %p388 = scmp.ne.s32.totalorder %s379, %s380
      %p389 = scmp.eq.s32.totalorder %s37, 0
      %p390 = por %p388, %p389
      %p391 = scmp.ne.s32.totalorder %s379, %s380
      %p392 = scmp.eq.s32.totalorder %s38, 1
      %p393 = por %p391, %p392
      %p395 = scmp.ne.s32.totalorder %s380, %s394
      %p396 = scmp.eq.s32.totalorder %s38, 0
      %p397 = por %p395, %p396
      %s398 = ssub.s32 %s39, %s51
      %s399 = ssub.s32 %s40, %s47
      %s400 = sor.u32 %s398, %s399
      %p401 = scmp.eq.s32.totalorder %s400, 0
      %s403 = sadd.s32 %s402, 1
      %s404 = scalar_select %p401, %s402, %s403
      %p407 = pneg %p401
      %p408 = scmp.eq.s32.totalorder %s32, 1
      %p409 = por %p407, %p408
      %p410 = scmp.ne.s32.totalorder %s402, %s405
      %p411 = scmp.eq.s32.totalorder %s32, 0
      %p412 = por %p410, %p411
      %p413 = scmp.ne.s32.totalorder %s402, %s405
      %p414 = scmp.eq.s32.totalorder %s37, 1
      %p415 = por %p413, %p414
      %p416 = scmp.ne.s32.totalorder %s405, %s406
      %p417 = scmp.eq.s32.totalorder %s37, 0
      %p418 = por %p416, %p417
      %p419 = scmp.ne.s32.totalorder %s405, %s406
      %p420 = scmp.eq.s32.totalorder %s38, 1
      %p421 = por %p419, %p420
      %p423 = scmp.ne.s32.totalorder %s406, %s422
      %p424 = scmp.eq.s32.totalorder %s38, 0
      %p425 = por %p423, %p424
      %p426 = scmp.le.s32.totalorder 1, %s32
      %p427 = scmp.lt.s32.totalorder %s32, 3
      %p428 = pnand %p426, %p427
      %p429 = pneg %p428
      // Predicated region
      $region9: #{tpu_custom_call.1} parent=5 // pred_check
        _
      $region10: #{tpu_custom_call.1} parent=5 // pred_check_branch
        %431 = sbr.rel (%p428) target = $region12
      $region11: #{tpu_custom_call.1} parent=5 // pred_region
        %s432 = ssub.s32 %s32, 1
        // Predicated region
        $region13: #{tpu_custom_call.1} parent=11 // pred_check
          %p433 = pneg %p96
        $region14: #{tpu_custom_call.1} parent=11 // pred_check_branch
          %435 = sbr.rel (%p433) target = $region16
        $region15: #{tpu_custom_call.1} parent=11 // pred_region
          %437 = vsyncadd [#allocation7], 0
          %s438 = smul.addr %s42, 8
          %s439 = scalar_lea.hbm %s1, %s438
          %s441 = sshll.u32 %s439, 4
          %s442 = int_to_ptr.hbm [resolvable:$true] %s441
          %s443 = sshll.u32 [#allocation6], 4
          %s444 = int_to_ptr.vmem [resolvable:$true] %s443
          %446 = dma.hbm_to_vmem [thread:$0]  %s442, 128, %s444, [#allocation7]
        $region16: #{tpu_custom_call.1} parent=11 // pred_fallthru
          _
        // Predicated region
        $region17: #{tpu_custom_call.1} parent=11 // pred_check
          %p447 = pneg %p117
        $region18: #{tpu_custom_call.1} parent=11 // pred_check_branch
          %449 = sbr.rel (%p447) target = $region20
        $region19: #{tpu_custom_call.1} parent=11 // pred_region
          %451 = vsyncadd [#allocation7], 0
          %s452 = sshll.u32 %s2, 4
          %s453 = int_to_ptr.hbm [resolvable:$true] %s452
          %s454 = sshll.u32 [#allocation8], 4
          %s455 = int_to_ptr.vmem [resolvable:$true] %s454
          %460 = dma.hbm_to_vmem [thread:$0]  %s453, 1024, %s455, [#allocation7], 64, 64, 4
        $region20: #{tpu_custom_call.1} parent=11 // pred_fallthru
          _
        // Predicated region
        $region21: #{tpu_custom_call.1} parent=11 // pred_check
          %p461 = pneg %p138
        $region22: #{tpu_custom_call.1} parent=11 // pred_check_branch
          %463 = sbr.rel (%p461) target = $region24
        $region23: #{tpu_custom_call.1} parent=11 // pred_region
          %465 = vsyncadd [#allocation10], 0
          %s467 = sshll.u32 %s3, 4
          %s468 = int_to_ptr.hbm [resolvable:$true] %s467
          %s469 = sshll.u32 [#allocation9], 4
          %s470 = int_to_ptr.vmem [resolvable:$true] %s469
          %472 = dma.hbm_to_vmem [thread:$0]  %s468, 16, %s470, [#allocation10]
        $region24: #{tpu_custom_call.1} parent=11 // pred_fallthru
          _
        // Predicated region
        $region25: #{tpu_custom_call.1} parent=11 // pred_check
          %p473 = pneg %p159
        $region26: #{tpu_custom_call.1} parent=11 // pred_check_branch
          %475 = sbr.rel (%p473) target = $region28
        $region27: #{tpu_custom_call.1} parent=11 // pred_region
          %477 = vsyncadd [#allocation10], 0
          %s478 = sshll.u32 %s4, 4
          %s479 = int_to_ptr.hbm [resolvable:$true] %s478
          %s480 = sshll.u32 [#allocation11], 4
          %s481 = int_to_ptr.vmem [resolvable:$true] %s480
          %486 = dma.hbm_to_vmem [thread:$0]  %s479, 2048, %s481, [#allocation10], 128, 128, 8
        $region28: #{tpu_custom_call.1} parent=11 // pred_fallthru
          _
        // Predicated region
        $region29: #{tpu_custom_call.1} parent=11 // pred_check
          %p487 = pneg %p180
        $region30: #{tpu_custom_call.1} parent=11 // pred_check_branch
          %489 = sbr.rel (%p487) target = $region32
        $region31: #{tpu_custom_call.1} parent=11 // pred_region
          _
        $region32: #{tpu_custom_call.1} parent=11 // pred_fallthru
          _
        // Predicated region
        $region33: #{tpu_custom_call.1} parent=11 // pred_check
          %p490 = pneg %p201
        $region34: #{tpu_custom_call.1} parent=11 // pred_check_branch
          %492 = sbr.rel (%p490) target = $region36
        $region35: #{tpu_custom_call.1} parent=11 // pred_region
          %494 = vsyncadd [#allocation13], 0
          %s495 = sshll.u32 %s6, 4
          %s496 = int_to_ptr.hbm [resolvable:$true] %s495
          %s497 = sshll.u32 [#allocation12], 4
          %s498 = int_to_ptr.vmem [resolvable:$true] %s497
          %503 = dma.hbm_to_vmem [thread:$0]  %s496, 1024, %s498, [#allocation13], 64, 64, 4
        $region36: #{tpu_custom_call.1} parent=11 // pred_fallthru
          _
        // Predicated region
        $region37: #{tpu_custom_call.1} parent=11 // pred_check
          %p504 = pneg %p222
        $region38: #{tpu_custom_call.1} parent=11 // pred_check_branch
          %506 = sbr.rel (%p504) target = $region40
        $region39: #{tpu_custom_call.1} parent=11 // pred_region
          _
        $region40: #{tpu_custom_call.1} parent=11 // pred_fallthru
          _
        // Predicated region
        $region41: #{tpu_custom_call.1} parent=11 // pred_check
          %p507 = pneg %p243
        $region42: #{tpu_custom_call.1} parent=11 // pred_check_branch
          %509 = sbr.rel (%p507) target = $region44
        $region43: #{tpu_custom_call.1} parent=11 // pred_region
          _
        $region44: #{tpu_custom_call.1} parent=11 // pred_fallthru
          _
        // Predicated region
        $region45: #{tpu_custom_call.1} parent=11 // pred_check
          %p510 = pneg %p264
        $region46: #{tpu_custom_call.1} parent=11 // pred_check_branch
          %512 = sbr.rel (%p510) target = $region48
        $region47: #{tpu_custom_call.1} parent=11 // pred_region
          _
        $region48: #{tpu_custom_call.1} parent=11 // pred_fallthru
          _
        // Predicated region
        $region49: #{tpu_custom_call.1} parent=11 // pred_check
          %p513 = pneg %p285
        $region50: #{tpu_custom_call.1} parent=11 // pred_check_branch
          %515 = sbr.rel (%p513) target = $region52
        $region51: #{tpu_custom_call.1} parent=11 // pred_region
          %517 = vsyncadd [#allocation13], 0
          %s518 = sshll.u32 %s10, 4
          %s519 = int_to_ptr.hbm [resolvable:$true] %s518
          %s520 = sshll.u32 [#allocation14], 4
          %s521 = int_to_ptr.vmem [resolvable:$true] %s520
          %526 = dma.hbm_to_vmem [thread:$0]  %s519, 2048, %s521, [#allocation13], 128, 128, 8
        $region52: #{tpu_custom_call.1} parent=11 // pred_fallthru
          _
        // Predicated region
        $region53: #{tpu_custom_call.1} parent=11 // pred_check
          %p527 = pneg %p306
        $region54: #{tpu_custom_call.1} parent=11 // pred_check_branch
          %529 = sbr.rel (%p527) target = $region56
        $region55: #{tpu_custom_call.1} parent=11 // pred_region
          _
        $region56: #{tpu_custom_call.1} parent=11 // pred_fallthru
          _
        // Predicated region
        $region57: #{tpu_custom_call.1} parent=11 // pred_check
          %p530 = pneg %p327
        $region58: #{tpu_custom_call.1} parent=11 // pred_check_branch
          %532 = sbr.rel (%p530) target = $region60
        $region59: #{tpu_custom_call.1} parent=11 // pred_region
          %534 = vsyncadd [#allocation16], 0
          %s535 = sshll.u32 %s12, 4
          %s536 = int_to_ptr.hbm [resolvable:$true] %s535
          %s537 = sshll.u32 [#allocation15], 4
          %s538 = int_to_ptr.vmem [resolvable:$true] %s537
          %543 = dma.hbm_to_vmem [thread:$0]  %s536, 2048, %s538, [#allocation16], 64, 64, 4
        $region60: #{tpu_custom_call.1} parent=11 // pred_fallthru
          _
        // Predicated region
        $region61: #{tpu_custom_call.1} parent=11 // pred_check
          %p544 = pneg %p348
        $region62: #{tpu_custom_call.1} parent=11 // pred_check_branch
          %546 = sbr.rel (%p544) target = $region64
        $region63: #{tpu_custom_call.1} parent=11 // pred_region
          _
        $region64: #{tpu_custom_call.1} parent=11 // pred_fallthru
          _
        // Predicated region
        $region65: #{tpu_custom_call.1} parent=11 // pred_check
          %p547 = pneg %p369
        $region66: #{tpu_custom_call.1} parent=11 // pred_check_branch
          %549 = sbr.rel (%p547) target = $region68
        $region67: #{tpu_custom_call.1} parent=11 // pred_region
          _
        $region68: #{tpu_custom_call.1} parent=11 // pred_fallthru
          _
        // Predicated region
        $region69: #{tpu_custom_call.1} parent=11 // pred_check
          %p550 = pneg %p390
        $region70: #{tpu_custom_call.1} parent=11 // pred_check_branch
          %552 = sbr.rel (%p550) target = $region72
        $region71: #{tpu_custom_call.1} parent=11 // pred_region
          _
        $region72: #{tpu_custom_call.1} parent=11 // pred_fallthru
          _
      $region12: #{tpu_custom_call.1} parent=5 // pred_fallthru
        _
      %p553 = scmp.lt.s32.totalorder %s32, 2
      // Predicated region
      $region73: #{tpu_custom_call.1} parent=5 // pred_check
        %p554 = pneg %p553
      $region74: #{tpu_custom_call.1} parent=5 // pred_check_branch
        %556 = sbr.rel (%p554) target = $region76
      $region75: #{tpu_custom_call.1} parent=5 // pred_region
        // Predicated region
        $region77: #{tpu_custom_call.1} parent=75 // pred_check
          %p557 = pneg %p64
        $region78: #{tpu_custom_call.1} parent=75 // pred_check_branch
          %559 = sbr.rel (%p557) target = $region80
        $region79: #{tpu_custom_call.1} parent=75 // pred_region
          %s560 = sand.u32 %s54, 1
          %s561 = scalar_lea.sflag [#allocation4], %s560
          %s562 = sand.u32 %s54, 1
          %s563 = smul.addr %s562, 8
          %s564 = scalar_lea.vmem [#allocation3], %s563
          %566 = vsyncadd %s561, 0
          %s567 = smul.addr %s39, 8
          %s568 = scalar_lea.hbm %s0, %s567
          %s570 = sshll.u32 %s568, 4
          %s571 = int_to_ptr.hbm [resolvable:$true] %s570
          %s572 = sshll.u32 %s564, 4
          %s573 = int_to_ptr.vmem [resolvable:$true] %s572
          %575 = dma.hbm_to_vmem [thread:$0]  %s571, 128, %s573, %s561
        $region80: #{tpu_custom_call.1} parent=75 // pred_fallthru
          _
      $region76: #{tpu_custom_call.1} parent=5 // pred_fallthru
        _
      %p576 = scmp.le.s32.totalorder 1, %s32
      %p577 = scmp.lt.s32.totalorder %s32, 3
      %p578 = pnand %p576, %p577
      %p579 = pneg %p578
      // Predicated region
      $region81: #{tpu_custom_call.1} parent=5 // pred_check
        _
      $region82: #{tpu_custom_call.1} parent=5 // pred_check_branch
        %581 = sbr.rel (%p578) target = $region84
      $region83: #{tpu_custom_call.1} parent=5 // pred_region
        %s582 = ssub.s32 %s32, 1
        %s583 = sand.u32 %s57, 1
        %s584 = scalar_lea.sflag [#allocation4], %s583
        %s585 = sand.u32 %s57, 1
        %s586 = smul.addr %s585, 8
        %s587 = scalar_lea.vmem [#allocation3], %s586
        // Predicated region
        $region85: #{tpu_custom_call.1} parent=83 // pred_check
          %p588 = pneg %p70
        $region86: #{tpu_custom_call.1} parent=83 // pred_check_branch
          %590 = sbr.rel (%p588) target = $region88
        $region87: #{tpu_custom_call.1} parent=83 // pred_region
          %592 = dma.done %s584, 128
        $region88: #{tpu_custom_call.1} parent=83 // pred_fallthru
          _
        // Predicated region
        $region89: #{tpu_custom_call.1} parent=83 // pred_check
          %p593 = pneg %p96
        $region90: #{tpu_custom_call.1} parent=83 // pred_check_branch
          %595 = sbr.rel (%p593) target = $region92
        $region91: #{tpu_custom_call.1} parent=83 // pred_region
          %597 = dma.done [#allocation7], 128
        $region92: #{tpu_custom_call.1} parent=83 // pred_fallthru
          _
        // Predicated region
        $region93: #{tpu_custom_call.1} parent=83 // pred_check
          %p598 = pneg %p117
        $region94: #{tpu_custom_call.1} parent=83 // pred_check_branch
          %600 = sbr.rel (%p598) target = $region96
        $region95: #{tpu_custom_call.1} parent=83 // pred_region
          %602 = dma.done [#allocation7], 1024
        $region96: #{tpu_custom_call.1} parent=83 // pred_fallthru
          _
        // Predicated region
        $region97: #{tpu_custom_call.1} parent=83 // pred_check
          %p603 = pneg %p138
        $region98: #{tpu_custom_call.1} parent=83 // pred_check_branch
          %605 = sbr.rel (%p603) target = $region100
        $region99: #{tpu_custom_call.1} parent=83 // pred_region
          %607 = dma.done [#allocation10], 16
        $region100: #{tpu_custom_call.1} parent=83 // pred_fallthru
          _
        // Predicated region
        $region101: #{tpu_custom_call.1} parent=83 // pred_check
          %p608 = pneg %p159
        $region102: #{tpu_custom_call.1} parent=83 // pred_check_branch
          %610 = sbr.rel (%p608) target = $region104
        $region103: #{tpu_custom_call.1} parent=83 // pred_region
          %612 = dma.done [#allocation10], 2048
        $region104: #{tpu_custom_call.1} parent=83 // pred_fallthru
          _
        // Predicated region
        $region105: #{tpu_custom_call.1} parent=83 // pred_check
          %p613 = pneg %p201
        $region106: #{tpu_custom_call.1} parent=83 // pred_check_branch
          %615 = sbr.rel (%p613) target = $region108
        $region107: #{tpu_custom_call.1} parent=83 // pred_region
          %617 = dma.done [#allocation13], 1024
        $region108: #{tpu_custom_call.1} parent=83 // pred_fallthru
          _
        // Predicated region
        $region109: #{tpu_custom_call.1} parent=83 // pred_check
          %p618 = pneg %p285
        $region110: #{tpu_custom_call.1} parent=83 // pred_check_branch
          %620 = sbr.rel (%p618) target = $region112
        $region111: #{tpu_custom_call.1} parent=83 // pred_region
          %622 = dma.done [#allocation13], 2048
        $region112: #{tpu_custom_call.1} parent=83 // pred_fallthru
          _
        // Predicated region
        $region113: #{tpu_custom_call.1} parent=83 // pred_check
          %p623 = pneg %p327
        $region114: #{tpu_custom_call.1} parent=83 // pred_check_branch
          %625 = sbr.rel (%p623) target = $region116
        $region115: #{tpu_custom_call.1} parent=83 // pred_region
          %627 = dma.done [#allocation16], 2048
        $region116: #{tpu_custom_call.1} parent=83 // pred_fallthru
          _
        %s628 = sand.u32 %s57, 1
        %s629 = scalar_lea.sflag [#allocation4], %s628
        %s630 = sand.u32 %s57, 1
        %s631 = smul.addr %s630, 8
        %s632 = scalar_lea.vmem [#allocation3], %s631
        %p633 = pneg %p70
        %p634 = pneg %p67
        %p635 = pneg %p96
        %p636 = pneg %p93
        %p637 = pneg %p117
        %p638 = pneg %p114
        %p639 = pneg %p138
        %p640 = pneg %p135
        %p641 = pneg %p159
        %p642 = pneg %p156
        %p643 = pneg %p180
        %p644 = pneg %p177
        %p645 = pneg %p201
        %p646 = pneg %p198
        %p647 = pneg %p222
        %p648 = pneg %p219
        %p649 = pneg %p243
        %p650 = pneg %p240
        %p651 = pneg %p264
        %p652 = pneg %p261
        %p653 = pneg %p285
        %p654 = pneg %p282
        %p655 = pneg %p306
        %p656 = pneg %p303
        %p657 = pneg %p327
        %p658 = pneg %p324
        %p659 = pneg %p348
        %p660 = pneg %p345
        %p661 = pneg %p369
        %p662 = pneg %p366
        %p663 = pneg %p390
        %p664 = pneg %p387
        %p665 = pneg %p418
        %p666 = pneg %p415
        %s667 = sand.u32 %s405, 1
        %s668 = scalar_lea.sflag [#allocation5], %s667
        %s669 = sand.u32 %s405, 1
        %s670 = smul.addr %s669, 8
        %s671 = scalar_lea.vmem [#allocation17], %s670
        %p673 = scmp.eq.s32.totalorder %s42, 0
        // Predicated region
        $region117: #{tpu_custom_call.1} parent=83 // pred_check
          %p674 = pneg %p673
        $region118: #{tpu_custom_call.1} parent=83 // pred_check_branch
          %676 = sbr.rel (%p674) target = $region120
        $region119: #{tpu_custom_call.1} parent=83 // pred_region
          %v677 = vld [vmem:[%s587] sm:$0xff]
          %v678 = vpack.c.bf16 %v677, %v677
          %v679 = vld [vmem:[#allocation11] sm:$0xff]
          %v680 = vld [vmem:[#allocation11 + $0x8] sm:$0xff]
          %v681 = vld [vmem:[#allocation11 + $0x10] sm:$0xff]
          %v682 = vld [vmem:[#allocation11 + $0x18] sm:$0xff]
          %v683 = vld [vmem:[#allocation11 + $0x20] sm:$0xff]
          %v684 = vld [vmem:[#allocation11 + $0x28] sm:$0xff]
          %v685 = vld [vmem:[#allocation11 + $0x30] sm:$0xff]
          %v686 = vld [vmem:[#allocation11 + $0x38] sm:$0xff]
          %v687 = vld [vmem:[#allocation11 + $0x40] sm:$0xff]
          %v688 = vld [vmem:[#allocation11 + $0x48] sm:$0xff]
          %v689 = vld [vmem:[#allocation11 + $0x50] sm:$0xff]
          %v690 = vld [vmem:[#allocation11 + $0x58] sm:$0xff]
          %v691 = vld [vmem:[#allocation11 + $0x60] sm:$0xff]
          %v692 = vld [vmem:[#allocation11 + $0x68] sm:$0xff]
          %v693 = vld [vmem:[#allocation11 + $0x70] sm:$0xff]
          %v694 = vld [vmem:[#allocation11 + $0x78] sm:$0xff]
          %v695 = vld [vmem:[%s5] sm:$0x3]
          %v697 = vperm.slane %v695, 0
          %v698 = vperm.slane %v695, 1
          %v717 = vunpack.c.l.b16 %v679
          %v718 = vunpack.c.h.b16 %v679
          %v719 = vunpack.c.l.b16 %v680
          %v720 = vunpack.c.h.b16 %v680
          %v721 = vunpack.c.l.b16 %v681
          %v722 = vunpack.c.h.b16 %v681
          %v723 = vunpack.c.l.b16 %v682
          %v724 = vunpack.c.h.b16 %v682
          %v725 = vunpack.c.l.b16 %v683
          %v726 = vunpack.c.h.b16 %v683
          %v727 = vunpack.c.l.b16 %v684
          %v728 = vunpack.c.h.b16 %v684
          %v729 = vunpack.c.l.b16 %v685
          %v730 = vunpack.c.h.b16 %v685
          %v731 = vunpack.c.l.b16 %v686
          %v732 = vunpack.c.h.b16 %v686
          %v733 = vunpack.c.l.b16 %v687
          %v734 = vunpack.c.h.b16 %v687
          %v735 = vunpack.c.l.b16 %v688
          %v736 = vunpack.c.h.b16 %v688
          %v737 = vunpack.c.l.b16 %v689
          %v738 = vunpack.c.h.b16 %v689
          %v739 = vunpack.c.l.b16 %v690
          %v740 = vunpack.c.h.b16 %v690
          %v741 = vunpack.c.l.b16 %v691
          %v742 = vunpack.c.h.b16 %v691
          %v743 = vunpack.c.l.b16 %v692
          %v744 = vunpack.c.h.b16 %v692
          %v745 = vunpack.c.l.b16 %v693
          %v746 = vunpack.c.h.b16 %v693
          %v747 = vunpack.c.l.b16 %v694
          %v748 = vunpack.c.h.b16 %v694
          %v749 = vpack.c.b16 %v719, %v717
          %v750 = vpack.c.b16 %v720, %v718
          %v751 = vpack.c.b16 %v723, %v721
          %v752 = vpack.c.b16 %v724, %v722
          %v753 = vpack.c.b16 %v727, %v725
          %v754 = vpack.c.b16 %v728, %v726
          %v755 = vpack.c.b16 %v731, %v729
          %v756 = vpack.c.b16 %v732, %v730
          %v757 = vpack.c.b16 %v735, %v733
          %v758 = vpack.c.b16 %v736, %v734
          %v759 = vpack.c.b16 %v739, %v737
          %v760 = vpack.c.b16 %v740, %v738
          %v761 = vpack.c.b16 %v743, %v741
          %v762 = vpack.c.b16 %v744, %v742
          %v763 = vpack.c.b16 %v747, %v745
          %v764 = vpack.c.b16 %v748, %v746
          %781 = vmatpush.bf16.msra.mxu0 %v763
          %782 = vmatpush.bf16.msra.mxu0 %v761
          %783 = vmatpush.bf16.msra.mxu0 %v759
          %784 = vmatpush.bf16.msra.mxu0 %v757
          %785 = vmatpush.bf16.msra.mxu0 %v755
          %786 = vmatpush.bf16.msra.mxu0 %v753
          %787 = vmatpush.bf16.msra.mxu0 %v751
          %788 = vmatpush.bf16.msra.mxu0 %v749
          %789 = vmatmul.bf16.gmra.mxu0 %v678
          %v790 = vpop.f32.mrf.mxu0
          %v791 = vadd.f32 %v697, %v790
          %v792 = vpop.f32.mrf.mxu0
          %793 = vdwg.mxu0
          %794 = vmatpush.bf16.msra.mxu0 %v764
          %795 = vmatpush.bf16.msra.mxu0 %v762
          %796 = vmatpush.bf16.msra.mxu0 %v760
          %797 = vmatpush.bf16.msra.mxu0 %v758
          %798 = vmatpush.bf16.msra.mxu0 %v756
          %799 = vmatpush.bf16.msra.mxu0 %v754
          %800 = vmatpush.bf16.msra.mxu0 %v752
          %801 = vmatpush.bf16.msra.mxu0 %v750
          %802 = vmatmul.bf16.gmra.mxu0 %v678
          %v803 = vpop.f32.mrf.mxu0
          %v804 = vadd.f32 %v698, %v803
          %v805 = vpop.f32.mrf.mxu0
          %806 = vdwg.mxu0
          %v807 = vpack.c.bf16 %v804, %v791
          %808 = vst [vmem:[#allocation2] sm:$0xff] %v807
        $region120: #{tpu_custom_call.1} parent=83 // pred_fallthru
          _
        %s809 = smul.u32 %s42, 8
        %s810 = scalar_lea.vmem %s587, %s809 [#allocation3]
        %v811 = vld [vmem:[%s810] sm:$0xff]
        %v812 = vld [vmem:[#allocation6] sm:$0xff]
        %v813 = vpack.c.bf16 %v811, %v811
        %v814 = vld [vmem:[#allocation8] sm:$0xf]
        %v815 = vld [vmem:[#allocation8 + $0x4] sm:$0xf]
        %v816 = vld [vmem:[#allocation8 + $0x8] sm:$0xf]
        %v817 = vld [vmem:[#allocation8 + $0xc] sm:$0xf]
        %v818 = vld [vmem:[#allocation8 + $0x10] sm:$0xf]
        %v819 = vld [vmem:[#allocation8 + $0x14] sm:$0xf]
        %v820 = vld [vmem:[#allocation8 + $0x18] sm:$0xf]
        %v821 = vld [vmem:[#allocation8 + $0x1c] sm:$0xf]
        %v822 = vld [vmem:[#allocation8 + $0x20] sm:$0xf]
        %v823 = vld [vmem:[#allocation8 + $0x24] sm:$0xf]
        %v824 = vld [vmem:[#allocation8 + $0x28] sm:$0xf]
        %v825 = vld [vmem:[#allocation8 + $0x2c] sm:$0xf]
        %v826 = vld [vmem:[#allocation8 + $0x30] sm:$0xf]
        %v827 = vld [vmem:[#allocation8 + $0x34] sm:$0xf]
        %v828 = vld [vmem:[#allocation8 + $0x38] sm:$0xf]
        %v829 = vld [vmem:[#allocation8 + $0x3c] sm:$0xf]
        %v830 = vld [vmem:[#allocation9] sm:$0x1]
        %v832 = vperm.slane %v830, 0
        %v850 = vunpack.c.l.b16 %v814
        %v851 = vunpack.c.l.b16 %v815
        %v852 = vunpack.c.l.b16 %v816
        %v853 = vunpack.c.l.b16 %v817
        %v854 = vunpack.c.l.b16 %v818
        %v855 = vunpack.c.l.b16 %v819
        %v856 = vunpack.c.l.b16 %v820
        %v857 = vunpack.c.l.b16 %v821
        %v858 = vunpack.c.l.b16 %v822
        %v859 = vunpack.c.l.b16 %v823
        %v860 = vunpack.c.l.b16 %v824
        %v861 = vunpack.c.l.b16 %v825
        %v862 = vunpack.c.l.b16 %v826
        %v863 = vunpack.c.l.b16 %v827
        %v864 = vunpack.c.l.b16 %v828
        %v865 = vunpack.c.l.b16 %v829
        %v866 = vpack.c.b16 %v851, %v850
        %v867 = vpack.c.b16 %v853, %v852
        %v868 = vpack.c.b16 %v855, %v854
        %v869 = vpack.c.b16 %v857, %v856
        %v870 = vpack.c.b16 %v859, %v858
        %v871 = vpack.c.b16 %v861, %v860
        %v872 = vpack.c.b16 %v863, %v862
        %v873 = vpack.c.b16 %v865, %v864
        %882 = vmatpush.bf16.msra.mxu0 %v873
        %883 = vmatpush.bf16.msra.mxu0 %v872
        %884 = vmatpush.bf16.msra.mxu0 %v871
        %885 = vmatpush.bf16.msra.mxu0 %v870
        %886 = vmatpush.bf16.msra.mxu0 %v869
        %887 = vmatpush.bf16.msra.mxu0 %v868
        %888 = vmatpush.bf16.msra.mxu0 %v867
        %889 = vmatpush.bf16.msra.mxu0 %v866
        %890 = vmatmul.bf16.gmra.mxu0 %v813
        %v891 = vpop.f32.mrf.mxu0
        %v892 = vadd.f32 %v832, %v891
        %v893 = vpop.f32.mrf.mxu0
        %894 = vdwg.mxu0
        %v895 = vpack.c.bf16 %v892, %v892
        %v896 = vld [vmem:[#allocation2] sm:$0xf]
        %v897 = vld [vmem:[#allocation2 + $0x4] sm:$0xf]
        %vm898 = vcmask 261120
        %v900 = vsel %vm898, %v895, 0
        %v903 = vsel %vm898, %v896, 0
        %905 = vmatpush.bf16.xpose.msra.mxu0 0
        %906 = vmatpush.bf16.xpose.msra.mxu0 0
        %907 = vmatpush.bf16.xpose.msra.mxu0 0
        %908 = vmatpush.bf16.xpose.msra.mxu0 0
        %909 = vmatpush.bf16.xpose.msra.mxu0 0
        %910 = vmatpush.bf16.xpose.msra.mxu0 0
        %911 = vmatpush.bf16.xpose.msra.mxu0 0
        %912 = vmatpush.bf16.xpose.msra.mxu0 %v903
        %913 = vmatmul.bf16.gmra.mxu0 %v900
        %v914 = vpop.f32.mrf.mxu0
        %v915 = vadd.f32 %v812, %v914
        %v916 = vpop.f32.mrf.mxu0
        %917 = vdwg.mxu0
        %vm918 = vcmask 64512
        %v919 = vsel %vm918, %v915, -inf
        %920 = vmax.xlane.f32.xlu0 %v919
        %v921 = vpop.xlane.xlu0 %920
        %v922 = vsub.f32 %v915, %v921
        %v923 = vmul.f32 %v922, 1.442695
        %v924 = vpow.pop %v923
        %v925 = vsel %vm918, %v924, 0.0
        %926 = vadd.xlane.f32.xlu0 %v925
        %v927 = vpop.xlane.xlu0 %926
        %v928 = vrcp.pop %v927
        %v929 = vmul.f32 %v924, %v928
        %v930 = vpack.c.bf16 %v929, %v929
        %v932 = vsel %vm918, %v930, 0
        %vm934 = vcmask 1043456
        %v936 = vsel %vm934, %v897, 0
        %938 = vmatpush.bf16.msra.mxu0 0
        %939 = vmatpush.bf16.msra.mxu0 0
        %940 = vmatpush.bf16.msra.mxu0 0
        %941 = vmatpush.bf16.msra.mxu0 0
        %942 = vmatpush.bf16.msra.mxu0 0
        %943 = vmatpush.bf16.msra.mxu0 0
        %944 = vmatpush.bf16.msra.mxu0 0
        %945 = vmatpush.bf16.msra.mxu0 %v936
        %946 = vmatmul.bf16.gmra.mxu0 %v932
        %v947 = vpop.f32.mrf.mxu0
        %v948 = vadd.f32 0.0, %v947
        %v949 = vpop.f32.mrf.mxu0
        %950 = vdwg.mxu0
        %v951 = vpack.c.bf16 %v948, %v948
        %v952 = vld [vmem:[#allocation12] sm:$0xf]
        %v953 = vld [vmem:[#allocation12 + $0x4] sm:$0xf]
        %v954 = vld [vmem:[#allocation12 + $0x8] sm:$0xf]
        %v955 = vld [vmem:[#allocation12 + $0xc] sm:$0xf]
        %957 = vrot.lane.b32.xlu0 %v895, 96
        %v958 = vpop.permute.xlu0 %957
        %v960 = vunpack.c.l.b16 %v896
        %v961 = vpack.c.b16 %v960, %v960
        %962 = vrot.lane.b32.xlu0 %v961, 96
        %v963 = vpop.permute.xlu0 %962
        %v965 = vsel %vm898, %v958, 0
        %v968 = vsel %vm898, %v963, 0
        %970 = vmatpush.bf16.xpose.msra.mxu0 0
        %971 = vmatpush.bf16.xpose.msra.mxu0 0
        %972 = vmatpush.bf16.xpose.msra.mxu0 0
        %973 = vmatpush.bf16.xpose.msra.mxu0 0
        %974 = vmatpush.bf16.xpose.msra.mxu0 0
        %975 = vmatpush.bf16.xpose.msra.mxu0 0
        %976 = vmatpush.bf16.xpose.msra.mxu0 0
        %977 = vmatpush.bf16.xpose.msra.mxu0 %v968
        %978 = vmatmul.bf16.gmra.mxu0 %v965
        %v979 = vpop.f32.mrf.mxu0
        %v980 = vadd.f32 %v812, %v979
        %v981 = vpop.f32.mrf.mxu0
        %982 = vdwg.mxu0
        %v983 = vsel %vm918, %v980, -inf
        %984 = vmax.xlane.f32.xlu0 %v983
        %v985 = vpop.xlane.xlu0 %984
        %v986 = vsub.f32 %v980, %v985
        %v987 = vmul.f32 %v986, 1.442695
        %v988 = vpow.pop %v987
        %v989 = vsel %vm918, %v988, 0.0
        %990 = vadd.xlane.f32.xlu0 %v989
        %v991 = vpop.xlane.xlu0 %990
        %v992 = vrcp.pop %v991
        %v993 = vmul.f32 %v988, %v992
        %v994 = vpack.c.bf16 %v993, %v993
        %v996 = vunpack.c.l.b16 %v897
        %v997 = vpack.c.b16 %v996, %v996
        %998 = vrot.lane.b32.xlu0 %v997, 96
        %v999 = vpop.permute.xlu0 %998
        %v1001 = vsel %vm918, %v994, 0
        %v1004 = vsel %vm934, %v999, 0
        %1006 = vmatpush.bf16.msra.mxu0 0
        %1007 = vmatpush.bf16.msra.mxu0 0
        %1008 = vmatpush.bf16.msra.mxu0 0
        %1009 = vmatpush.bf16.msra.mxu0 0
        %1010 = vmatpush.bf16.msra.mxu0 0
        %1011 = vmatpush.bf16.msra.mxu0 0
        %1012 = vmatpush.bf16.msra.mxu0 0
        %1013 = vmatpush.bf16.msra.mxu0 %v1004
        %1014 = vmatmul.bf16.gmra.mxu0 %v1001
        %v1015 = vpop.f32.mrf.mxu0
        %v1016 = vadd.f32 0.0, %v1015
        %v1017 = vpop.f32.mrf.mxu0
        %1018 = vdwg.mxu0
        %v1019 = vpack.c.bf16 %v1016, %v1016
        %v1020 = vld [vmem:[#allocation12 + $0x10] sm:$0xf]
        %v1021 = vld [vmem:[#allocation12 + $0x14] sm:$0xf]
        %v1022 = vld [vmem:[#allocation12 + $0x18] sm:$0xf]
        %v1023 = vld [vmem:[#allocation12 + $0x1c] sm:$0xf]
        %v1028 = vunpack.c.l.b16 %v1020
        %v1029 = vunpack.c.l.b16 %v1021
        %v1030 = vunpack.c.l.b16 %v1022
        %v1031 = vunpack.c.l.b16 %v1023
        %v1032 = vpack.c.b16 %v1029, %v1028
        %v1033 = vpack.c.b16 %v1031, %v1030
        %v1037 = vsel %vm898, %v1019, 0
        %1039 = vmatpush.bf16.msra.mxu0 0
        %1040 = vmatpush.bf16.msra.mxu0 0
        %1041 = vmatpush.bf16.msra.mxu0 0
        %1042 = vmatpush.bf16.msra.mxu0 0
        %1043 = vmatpush.bf16.msra.mxu0 0
        %1044 = vmatpush.bf16.msra.mxu0 0
        %1045 = vmatpush.bf16.msra.mxu0 %v1033
        %1046 = vmatpush.bf16.msra.mxu0 %v1032
        %1047 = vmatmul.bf16.gmra.mxu0 %v1037
        %v1048 = vpop.f32.mrf.mxu0
        %v1049 = vadd.f32 0.0, %v1048
        %v1050 = vpop.f32.mrf.mxu0
        %1051 = vdwg.mxu0
        %v1056 = vunpack.c.l.b16 %v952
        %v1057 = vunpack.c.l.b16 %v953
        %v1058 = vunpack.c.l.b16 %v954
        %v1059 = vunpack.c.l.b16 %v955
        %v1060 = vpack.c.b16 %v1057, %v1056
        %v1061 = vpack.c.b16 %v1059, %v1058
        %v1065 = vsel %vm898, %v951, 0
        %1067 = vmatpush.bf16.msra.mxu0 0
        %1068 = vmatpush.bf16.msra.mxu0 0
        %1069 = vmatpush.bf16.msra.mxu0 0
        %1070 = vmatpush.bf16.msra.mxu0 0
        %1071 = vmatpush.bf16.msra.mxu0 0
        %1072 = vmatpush.bf16.msra.mxu0 0
        %1073 = vmatpush.bf16.msra.mxu0 %v1061
        %1074 = vmatpush.bf16.msra.mxu0 %v1060
        %1075 = vmatmul.bf16.gmra.mxu0 %v1065
        %v1076 = vpop.f32.mrf.mxu0
        %v1077 = vadd.f32 %v1049, %v1076
        %v1078 = vpop.f32.mrf.mxu0
        %1079 = vdwg.mxu0
        %1080 = vrot.lane.b32.xlu0 %v895, 64
        %v1081 = vpop.permute.xlu0 %1080
        %1082 = vrot.lane.b32.xlu0 %v961, 64
        %v1083 = vpop.permute.xlu0 %1082
        %v1085 = vsel %vm898, %v1081, 0
        %v1088 = vsel %vm898, %v1083, 0
        %1090 = vmatpush.bf16.xpose.msra.mxu0 0
        %1091 = vmatpush.bf16.xpose.msra.mxu0 0
        %1092 = vmatpush.bf16.xpose.msra.mxu0 0
        %1093 = vmatpush.bf16.xpose.msra.mxu0 0
        %1094 = vmatpush.bf16.xpose.msra.mxu0 0
        %1095 = vmatpush.bf16.xpose.msra.mxu0 0
        %1096 = vmatpush.bf16.xpose.msra.mxu0 0
        %1097 = vmatpush.bf16.xpose.msra.mxu0 %v1088
        %1098 = vmatmul.bf16.gmra.mxu0 %v1085
        %v1099 = vpop.f32.mrf.mxu0
        %v1100 = vadd.f32 %v812, %v1099
        %v1101 = vpop.f32.mrf.mxu0
        %1102 = vdwg.mxu0
        %v1103 = vsel %vm918, %v1100, -inf
        %1104 = vmax.xlane.f32.xlu0 %v1103
        %v1105 = vpop.xlane.xlu0 %1104
        %v1106 = vsub.f32 %v1100, %v1105
        %v1107 = vmul.f32 %v1106, 1.442695
        %v1108 = vpow.pop %v1107
        %v1109 = vsel %vm918, %v1108, 0.0
        %1110 = vadd.xlane.f32.xlu0 %v1109
        %v1111 = vpop.xlane.xlu0 %1110
        %v1112 = vrcp.pop %v1111
        %v1113 = vmul.f32 %v1108, %v1112
        %v1114 = vpack.c.bf16 %v1113, %v1113
        %1115 = vrot.lane.b32.xlu0 %v997, 64
        %v1116 = vpop.permute.xlu0 %1115
        %v1118 = vsel %vm918, %v1114, 0
        %v1121 = vsel %vm934, %v1116, 0
        %1123 = vmatpush.bf16.msra.mxu0 0
        %1124 = vmatpush.bf16.msra.mxu0 0
        %1125 = vmatpush.bf16.msra.mxu0 0
        %1126 = vmatpush.bf16.msra.mxu0 0
        %1127 = vmatpush.bf16.msra.mxu0 0
        %1128 = vmatpush.bf16.msra.mxu0 0
        %1129 = vmatpush.bf16.msra.mxu0 0
        %1130 = vmatpush.bf16.msra.mxu0 %v1121
        %1131 = vmatmul.bf16.gmra.mxu0 %v1118
        %v1132 = vpop.f32.mrf.mxu0
        %v1133 = vadd.f32 0.0, %v1132
        %v1134 = vpop.f32.mrf.mxu0
        %1135 = vdwg.mxu0
        %v1136 = vpack.c.bf16 %v1133, %v1133
        %v1137 = vld [vmem:[#allocation12 + $0x20] sm:$0xf]
        %v1138 = vld [vmem:[#allocation12 + $0x24] sm:$0xf]
        %v1139 = vld [vmem:[#allocation12 + $0x28] sm:$0xf]
        %v1140 = vld [vmem:[#allocation12 + $0x2c] sm:$0xf]
        %v1145 = vunpack.c.l.b16 %v1137
        %v1146 = vunpack.c.l.b16 %v1138
        %v1147 = vunpack.c.l.b16 %v1139
        %v1148 = vunpack.c.l.b16 %v1140
        %v1149 = vpack.c.b16 %v1146, %v1145
        %v1150 = vpack.c.b16 %v1148, %v1147
        %v1154 = vsel %vm898, %v1136, 0
        %1156 = vmatpush.bf16.msra.mxu0 0
        %1157 = vmatpush.bf16.msra.mxu0 0
        %1158 = vmatpush.bf16.msra.mxu0 0
        %1159 = vmatpush.bf16.msra.mxu0 0
        %1160 = vmatpush.bf16.msra.mxu0 0
        %1161 = vmatpush.bf16.msra.mxu0 0
        %1162 = vmatpush.bf16.msra.mxu0 %v1150
        %1163 = vmatpush.bf16.msra.mxu0 %v1149
        %1164 = vmatmul.bf16.gmra.mxu0 %v1154
        %v1165 = vpop.f32.mrf.mxu0
        %v1166 = vadd.f32 0.0, %v1165
        %v1167 = vpop.f32.mrf.mxu0
        %1168 = vdwg.mxu0
        %v1169 = vadd.f32 %v1077, %v1166
        %1170 = vrot.lane.b32.xlu0 %v895, 32
        %v1171 = vpop.permute.xlu0 %1170
        %1172 = vrot.lane.b32.xlu0 %v961, 32
        %v1173 = vpop.permute.xlu0 %1172
        %v1175 = vsel %vm898, %v1171, 0
        %v1178 = vsel %vm898, %v1173, 0
        %1180 = vmatpush.bf16.xpose.msra.mxu0 0
        %1181 = vmatpush.bf16.xpose.msra.mxu0 0
        %1182 = vmatpush.bf16.xpose.msra.mxu0 0
        %1183 = vmatpush.bf16.xpose.msra.mxu0 0
        %1184 = vmatpush.bf16.xpose.msra.mxu0 0
        %1185 = vmatpush.bf16.xpose.msra.mxu0 0
        %1186 = vmatpush.bf16.xpose.msra.mxu0 0
        %1187 = vmatpush.bf16.xpose.msra.mxu0 %v1178
        %1188 = vmatmul.bf16.gmra.mxu0 %v1175
        %v1189 = vpop.f32.mrf.mxu0
        %v1190 = vadd.f32 %v812, %v1189
        %v1191 = vpop.f32.mrf.mxu0
        %1192 = vdwg.mxu0
        %v1193 = vsel %vm918, %v1190, -inf
        %1194 = vmax.xlane.f32.xlu0 %v1193
        %v1195 = vpop.xlane.xlu0 %1194
        %v1196 = vsub.f32 %v1190, %v1195
        %v1197 = vmul.f32 %v1196, 1.442695
        %v1198 = vpow.pop %v1197
        %v1199 = vsel %vm918, %v1198, 0.0
        %1200 = vadd.xlane.f32.xlu0 %v1199
        %v1201 = vpop.xlane.xlu0 %1200
        %v1202 = vrcp.pop %v1201
        %v1203 = vmul.f32 %v1198, %v1202
        %v1204 = vpack.c.bf16 %v1203, %v1203
        %1205 = vrot.lane.b32.xlu0 %v997, 32
        %v1206 = vpop.permute.xlu0 %1205
        %v1208 = vsel %vm918, %v1204, 0
        %v1211 = vsel %vm934, %v1206, 0
        %1213 = vmatpush.bf16.msra.mxu0 0
        %1214 = vmatpush.bf16.msra.mxu0 0
        %1215 = vmatpush.bf16.msra.mxu0 0
        %1216 = vmatpush.bf16.msra.mxu0 0
        %1217 = vmatpush.bf16.msra.mxu0 0
        %1218 = vmatpush.bf16.msra.mxu0 0
        %1219 = vmatpush.bf16.msra.mxu0 0
        %1220 = vmatpush.bf16.msra.mxu0 %v1211
        %1221 = vmatmul.bf16.gmra.mxu0 %v1208
        %v1222 = vpop.f32.mrf.mxu0
        %v1223 = vadd.f32 0.0, %v1222
        %v1224 = vpop.f32.mrf.mxu0
        %1225 = vdwg.mxu0
        %v1226 = vpack.c.bf16 %v1223, %v1223
        %v1227 = vld [vmem:[#allocation12 + $0x30] sm:$0xf]
        %v1228 = vld [vmem:[#allocation12 + $0x34] sm:$0xf]
        %v1229 = vld [vmem:[#allocation12 + $0x38] sm:$0xf]
        %v1230 = vld [vmem:[#allocation12 + $0x3c] sm:$0xf]
        %v1235 = vunpack.c.l.b16 %v1227
        %v1236 = vunpack.c.l.b16 %v1228
        %v1237 = vunpack.c.l.b16 %v1229
        %v1238 = vunpack.c.l.b16 %v1230
        %v1239 = vpack.c.b16 %v1236, %v1235
        %v1240 = vpack.c.b16 %v1238, %v1237
        %v1244 = vsel %vm898, %v1226, 0
        %1246 = vmatpush.bf16.msra.mxu0 0
        %1247 = vmatpush.bf16.msra.mxu0 0
        %1248 = vmatpush.bf16.msra.mxu0 0
        %1249 = vmatpush.bf16.msra.mxu0 0
        %1250 = vmatpush.bf16.msra.mxu0 0
        %1251 = vmatpush.bf16.msra.mxu0 0
        %1252 = vmatpush.bf16.msra.mxu0 %v1240
        %1253 = vmatpush.bf16.msra.mxu0 %v1239
        %1254 = vmatmul.bf16.gmra.mxu0 %v1244
        %v1255 = vpop.f32.mrf.mxu0
        %v1256 = vadd.f32 0.0, %v1255
        %v1257 = vpop.f32.mrf.mxu0
        %1258 = vdwg.mxu0
        %v1259 = vadd.f32 %v1169, %v1256
        %v1260 = vld [vmem:[%s7] sm:$0x1]
        %v1262 = vperm.slane %v1260, 0
        %v1264 = vadd.f32 %v1259, %v1262
        %v1265 = vadd.f32 %v811, %v1264
        %1266 = vadd.xlane.f32.xlu0 %v1265
        %v1267 = vpop.xlane.xlu0 %1266
        %v1268 = vrcp.pop 128.0
        %v1269 = vmul.f32 128.0, %v1268
        %v1270 = vsub.f32 1.0, %v1269
        %v1271 = vmul.f32 %v1268, %v1270
        %v1272 = vadd.f32 %v1268, %v1271
        %vm1273 = vweird.f32 %v1268
        %v1274 = vsel %vm1273, %v1268, %v1272
        %v1275 = vmul.f32 %v1267, %v1274
        %v1276 = vsub.f32 %v1265, %v1275
        %v1277 = vmul.f32 %v1276, %v1276
        %1278 = vadd.xlane.f32.xlu0 %v1277
        %v1279 = vpop.xlane.xlu0 %1278
        %v1280 = vmul.f32 %v1279, 0.007874016
        %v1281 = vrsqrt.pop %v1280
        %v1282 = vmul.f32 %v1281, %v1280
        %v1283 = vmul.f32 %v1282, %v1281
        %v1284 = vmul.f32 0.5, %v1283
        %v1285 = vsub.f32 1.5, %v1284
        %v1286 = vmul.f32 %v1281, %v1285
        %v1287 = vmul.f32 %v1280, %v1286
        %vm1288 = vcmp.eq.f32.partialorder %v1280, inf
        %v1289 = vsel %vm1288, %v1280, %v1287
        %vm1290 = vcmp.eq.f32.partialorder %v1280, 0.0
        %v1291 = vand.u32 %v1280, 2147483648
        %v1292 = vsel %vm1290, %v1291, %v1289
        %v1293 = vadd.f32 %v1292, 1e-05
        %v1294 = vrcp.pop %v1293
        %v1295 = vld [vmem:[%s8] sm:$0x1]
        %v1296 = vmul.f32 %v1276, %v1294
        %v1298 = vperm.slane %v1295, 0
        %v1300 = vmul.f32 %v1298, %v1296
        %v1301 = vld [vmem:[%s9] sm:$0x1]
        %v1303 = vperm.slane %v1301, 0
        %v1305 = vadd.f32 %v1300, %v1303
        %v1306 = vpack.c.bf16 %v1305, %v1305
        %v1307 = vld [vmem:[#allocation14] sm:$0xff]
        %v1308 = vld [vmem:[#allocation14 + $0x8] sm:$0xff]
        %v1309 = vld [vmem:[#allocation14 + $0x10] sm:$0xff]
        %v1310 = vld [vmem:[#allocation14 + $0x18] sm:$0xff]
        %v1311 = vld [vmem:[#allocation14 + $0x20] sm:$0xff]
        %v1312 = vld [vmem:[#allocation14 + $0x28] sm:$0xff]
        %v1313 = vld [vmem:[#allocation14 + $0x30] sm:$0xff]
        %v1314 = vld [vmem:[#allocation14 + $0x38] sm:$0xff]
        %v1315 = vld [vmem:[#allocation14 + $0x40] sm:$0xff]
        %v1316 = vld [vmem:[#allocation14 + $0x48] sm:$0xff]
        %v1317 = vld [vmem:[#allocation14 + $0x50] sm:$0xff]
        %v1318 = vld [vmem:[#allocation14 + $0x58] sm:$0xff]
        %v1319 = vld [vmem:[#allocation14 + $0x60] sm:$0xff]
        %v1320 = vld [vmem:[#allocation14 + $0x68] sm:$0xff]
        %v1321 = vld [vmem:[#allocation14 + $0x70] sm:$0xff]
        %v1322 = vld [vmem:[#allocation14 + $0x78] sm:$0xff]
        %v1323 = vld [vmem:[%s11] sm:$0x3]
        %v1325 = vperm.slane %v1323, 0
        %v1326 = vperm.slane %v1323, 1
        %v1345 = vunpack.c.l.b16 %v1307
        %v1346 = vunpack.c.h.b16 %v1307
        %v1347 = vunpack.c.l.b16 %v1308
        %v1348 = vunpack.c.h.b16 %v1308
        %v1349 = vunpack.c.l.b16 %v1309
        %v1350 = vunpack.c.h.b16 %v1309
        %v1351 = vunpack.c.l.b16 %v1310
        %v1352 = vunpack.c.h.b16 %v1310
        %v1353 = vunpack.c.l.b16 %v1311
        %v1354 = vunpack.c.h.b16 %v1311
        %v1355 = vunpack.c.l.b16 %v1312
        %v1356 = vunpack.c.h.b16 %v1312
        %v1357 = vunpack.c.l.b16 %v1313
        %v1358 = vunpack.c.h.b16 %v1313
        %v1359 = vunpack.c.l.b16 %v1314
        %v1360 = vunpack.c.h.b16 %v1314
        %v1361 = vunpack.c.l.b16 %v1315
        %v1362 = vunpack.c.h.b16 %v1315
        %v1363 = vunpack.c.l.b16 %v1316
        %v1364 = vunpack.c.h.b16 %v1316
        %v1365 = vunpack.c.l.b16 %v1317
        %v1366 = vunpack.c.h.b16 %v1317
        %v1367 = vunpack.c.l.b16 %v1318
        %v1368 = vunpack.c.h.b16 %v1318
        %v1369 = vunpack.c.l.b16 %v1319
        %v1370 = vunpack.c.h.b16 %v1319
        %v1371 = vunpack.c.l.b16 %v1320
        %v1372 = vunpack.c.h.b16 %v1320
        %v1373 = vunpack.c.l.b16 %v1321
        %v1374 = vunpack.c.h.b16 %v1321
        %v1375 = vunpack.c.l.b16 %v1322
        %v1376 = vunpack.c.h.b16 %v1322
        %v1377 = vpack.c.b16 %v1347, %v1345
        %v1378 = vpack.c.b16 %v1348, %v1346
        %v1379 = vpack.c.b16 %v1351, %v1349
        %v1380 = vpack.c.b16 %v1352, %v1350
        %v1381 = vpack.c.b16 %v1355, %v1353
        %v1382 = vpack.c.b16 %v1356, %v1354
        %v1383 = vpack.c.b16 %v1359, %v1357
        %v1384 = vpack.c.b16 %v1360, %v1358
        %v1385 = vpack.c.b16 %v1363, %v1361
        %v1386 = vpack.c.b16 %v1364, %v1362
        %v1387 = vpack.c.b16 %v1367, %v1365
        %v1388 = vpack.c.b16 %v1368, %v1366
        %v1389 = vpack.c.b16 %v1371, %v1369
        %v1390 = vpack.c.b16 %v1372, %v1370
        %v1391 = vpack.c.b16 %v1375, %v1373
        %v1392 = vpack.c.b16 %v1376, %v1374
        %1409 = vmatpush.bf16.msra.mxu0 %v1391
        %1410 = vmatpush.bf16.msra.mxu0 %v1389
        %1411 = vmatpush.bf16.msra.mxu0 %v1387
        %1412 = vmatpush.bf16.msra.mxu0 %v1385
        %1413 = vmatpush.bf16.msra.mxu0 %v1383
        %1414 = vmatpush.bf16.msra.mxu0 %v1381
        %1415 = vmatpush.bf16.msra.mxu0 %v1379
        %1416 = vmatpush.bf16.msra.mxu0 %v1377
        %1417 = vmatmul.bf16.gmra.mxu0 %v1306
        %v1418 = vpop.f32.mrf.mxu0
        %v1419 = vadd.f32 %v1325, %v1418
        %v1420 = vpop.f32.mrf.mxu0
        %1421 = vdwg.mxu0
        %1422 = vmatpush.bf16.msra.mxu0 %v1392
        %1423 = vmatpush.bf16.msra.mxu0 %v1390
        %1424 = vmatpush.bf16.msra.mxu0 %v1388
        %1425 = vmatpush.bf16.msra.mxu0 %v1386
        %1426 = vmatpush.bf16.msra.mxu0 %v1384
        %1427 = vmatpush.bf16.msra.mxu0 %v1382
        %1428 = vmatpush.bf16.msra.mxu0 %v1380
        %1429 = vmatpush.bf16.msra.mxu0 %v1378
        %1430 = vmatmul.bf16.gmra.mxu0 %v1306
        %v1431 = vpop.f32.mrf.mxu0
        %v1432 = vadd.f32 %v1326, %v1431
        %v1433 = vpop.f32.mrf.mxu0
        %1434 = vdwg.mxu0
        %v1435 = vmax.f32 %v1419, 0.0
        %v1436 = vmax.f32 %v1432, 0.0
        %v1437 = vpack.c.bf16 %v1435, %v1435
        %v1438 = vpack.c.bf16 %v1436, %v1436
        %v1439 = vld [vmem:[#allocation15] sm:$0xf]
        %v1440 = vld [vmem:[#allocation15 + $0x4] sm:$0xf]
        %v1441 = vld [vmem:[#allocation15 + $0x8] sm:$0xf]
        %v1442 = vld [vmem:[#allocation15 + $0xc] sm:$0xf]
        %v1443 = vld [vmem:[#allocation15 + $0x10] sm:$0xf]
        %v1444 = vld [vmem:[#allocation15 + $0x14] sm:$0xf]
        %v1445 = vld [vmem:[#allocation15 + $0x18] sm:$0xf]
        %v1446 = vld [vmem:[#allocation15 + $0x1c] sm:$0xf]
        %v1447 = vld [vmem:[#allocation15 + $0x20] sm:$0xf]
        %v1448 = vld [vmem:[#allocation15 + $0x24] sm:$0xf]
        %v1449 = vld [vmem:[#allocation15 + $0x28] sm:$0xf]
        %v1450 = vld [vmem:[#allocation15 + $0x2c] sm:$0xf]
        %v1451 = vld [vmem:[#allocation15 + $0x30] sm:$0xf]
        %v1452 = vld [vmem:[#allocation15 + $0x34] sm:$0xf]
        %v1453 = vld [vmem:[#allocation15 + $0x38] sm:$0xf]
        %v1454 = vld [vmem:[#allocation15 + $0x3c] sm:$0xf]
        %v1455 = vld [vmem:[#allocation15 + $0x40] sm:$0xf]
        %v1456 = vld [vmem:[#allocation15 + $0x44] sm:$0xf]
        %v1457 = vld [vmem:[#allocation15 + $0x48] sm:$0xf]
        %v1458 = vld [vmem:[#allocation15 + $0x4c] sm:$0xf]
        %v1459 = vld [vmem:[#allocation15 + $0x50] sm:$0xf]
        %v1460 = vld [vmem:[#allocation15 + $0x54] sm:$0xf]
        %v1461 = vld [vmem:[#allocation15 + $0x58] sm:$0xf]
        %v1462 = vld [vmem:[#allocation15 + $0x5c] sm:$0xf]
        %v1463 = vld [vmem:[#allocation15 + $0x60] sm:$0xf]
        %v1464 = vld [vmem:[#allocation15 + $0x64] sm:$0xf]
        %v1465 = vld [vmem:[#allocation15 + $0x68] sm:$0xf]
        %v1466 = vld [vmem:[#allocation15 + $0x6c] sm:$0xf]
        %v1467 = vld [vmem:[#allocation15 + $0x70] sm:$0xf]
        %v1468 = vld [vmem:[#allocation15 + $0x74] sm:$0xf]
        %v1469 = vld [vmem:[#allocation15 + $0x78] sm:$0xf]
        %v1470 = vld [vmem:[#allocation15 + $0x7c] sm:$0xf]
        %v1471 = vld [vmem:[%s13] sm:$0x1]
        %v1473 = vperm.slane %v1471, 0
        %v1507 = vunpack.c.l.b16 %v1439
        %v1508 = vunpack.c.l.b16 %v1440
        %v1509 = vunpack.c.l.b16 %v1441
        %v1510 = vunpack.c.l.b16 %v1442
        %v1511 = vunpack.c.l.b16 %v1443
        %v1512 = vunpack.c.l.b16 %v1444
        %v1513 = vunpack.c.l.b16 %v1445
        %v1514 = vunpack.c.l.b16 %v1446
        %v1515 = vunpack.c.l.b16 %v1447
        %v1516 = vunpack.c.l.b16 %v1448
        %v1517 = vunpack.c.l.b16 %v1449
        %v1518 = vunpack.c.l.b16 %v1450
        %v1519 = vunpack.c.l.b16 %v1451
        %v1520 = vunpack.c.l.b16 %v1452
        %v1521 = vunpack.c.l.b16 %v1453
        %v1522 = vunpack.c.l.b16 %v1454
        %v1523 = vunpack.c.l.b16 %v1455
        %v1524 = vunpack.c.l.b16 %v1456
        %v1525 = vunpack.c.l.b16 %v1457
        %v1526 = vunpack.c.l.b16 %v1458
        %v1527 = vunpack.c.l.b16 %v1459
        %v1528 = vunpack.c.l.b16 %v1460
        %v1529 = vunpack.c.l.b16 %v1461
        %v1530 = vunpack.c.l.b16 %v1462
        %v1531 = vunpack.c.l.b16 %v1463
        %v1532 = vunpack.c.l.b16 %v1464
        %v1533 = vunpack.c.l.b16 %v1465
        %v1534 = vunpack.c.l.b16 %v1466
        %v1535 = vunpack.c.l.b16 %v1467
        %v1536 = vunpack.c.l.b16 %v1468
        %v1537 = vunpack.c.l.b16 %v1469
        %v1538 = vunpack.c.l.b16 %v1470
        %v1539 = vpack.c.b16 %v1508, %v1507
        %v1540 = vpack.c.b16 %v1510, %v1509
        %v1541 = vpack.c.b16 %v1512, %v1511
        %v1542 = vpack.c.b16 %v1514, %v1513
        %v1543 = vpack.c.b16 %v1516, %v1515
        %v1544 = vpack.c.b16 %v1518, %v1517
        %v1545 = vpack.c.b16 %v1520, %v1519
        %v1546 = vpack.c.b16 %v1522, %v1521
        %v1547 = vpack.c.b16 %v1524, %v1523
        %v1548 = vpack.c.b16 %v1526, %v1525
        %v1549 = vpack.c.b16 %v1528, %v1527
        %v1550 = vpack.c.b16 %v1530, %v1529
        %v1551 = vpack.c.b16 %v1532, %v1531
        %v1552 = vpack.c.b16 %v1534, %v1533
        %v1553 = vpack.c.b16 %v1536, %v1535
        %v1554 = vpack.c.b16 %v1538, %v1537
        %1571 = vmatpush.bf16.msra.mxu0 %v1546
        %1572 = vmatpush.bf16.msra.mxu0 %v1545
        %1573 = vmatpush.bf16.msra.mxu0 %v1544
        %1574 = vmatpush.bf16.msra.mxu0 %v1543
        %1575 = vmatpush.bf16.msra.mxu0 %v1542
        %1576 = vmatpush.bf16.msra.mxu0 %v1541
        %1577 = vmatpush.bf16.msra.mxu0 %v1540
        %1578 = vmatpush.bf16.msra.mxu0 %v1539
        %1579 = vmatmul.bf16.gmra.mxu0 %v1437
        %v1580 = vpop.f32.mrf.mxu0
        %v1581 = vadd.f32 %v1473, %v1580
        %v1582 = vpop.f32.mrf.mxu0
        %1583 = vdwg.mxu0
        %1584 = vmatpush.bf16.msra.mxu0 %v1554
        %1585 = vmatpush.bf16.msra.mxu0 %v1553
        %1586 = vmatpush.bf16.msra.mxu0 %v1552
        %1587 = vmatpush.bf16.msra.mxu0 %v1551
        %1588 = vmatpush.bf16.msra.mxu0 %v1550
        %1589 = vmatpush.bf16.msra.mxu0 %v1549
        %1590 = vmatpush.bf16.msra.mxu0 %v1548
        %1591 = vmatpush.bf16.msra.mxu0 %v1547
        %1592 = vmatmul.bf16.gmra.mxu0 %v1438
        %v1593 = vpop.f32.mrf.mxu0
        %v1594 = vadd.f32 %v1581, %v1593
        %v1595 = vpop.f32.mrf.mxu0
        %1596 = vdwg.mxu0
        %v1597 = vadd.f32 %v1305, %v1594
        %1598 = vadd.xlane.f32.xlu0 %v1597
        %v1599 = vpop.xlane.xlu0 %1598
        %v1600 = vmul.f32 %v1599, %v1274
        %v1601 = vsub.f32 %v1597, %v1600
        %v1602 = vmul.f32 %v1601, %v1601
        %1603 = vadd.xlane.f32.xlu0 %v1602
        %v1604 = vpop.xlane.xlu0 %1603
        %v1605 = vmul.f32 %v1604, 0.007874016
        %v1606 = vrsqrt.pop %v1605
        %v1607 = vmul.f32 %v1606, %v1605
        %v1608 = vmul.f32 %v1607, %v1606
        %v1609 = vmul.f32 0.5, %v1608
        %v1610 = vsub.f32 1.5, %v1609
        %v1611 = vmul.f32 %v1606, %v1610
        %v1612 = vmul.f32 %v1605, %v1611
        %vm1613 = vcmp.eq.f32.partialorder %v1605, inf
        %v1614 = vsel %vm1613, %v1605, %v1612
        %vm1615 = vcmp.eq.f32.partialorder %v1605, 0.0
        %v1616 = vand.u32 %v1605, 2147483648
        %v1617 = vsel %vm1615, %v1616, %v1614
        %v1618 = vadd.f32 %v1617, 1e-05
        %v1619 = vrcp.pop %v1618
        %v1620 = vld [vmem:[%s14] sm:$0x1]
        %v1621 = vmul.f32 %v1601, %v1619
        %v1623 = vperm.slane %v1620, 0
        %v1625 = vmul.f32 %v1623, %v1621
        %v1626 = vld [vmem:[%s15] sm:$0x1]
        %v1628 = vperm.slane %v1626, 0
        %v1630 = vadd.f32 %v1625, %v1628
        %1631 = vst [vmem:[%s671] sm:$0xff] %v1630
        %s1632 = sand.u32 %s405, 1
        %s1633 = scalar_lea.sflag [#allocation5], %s1632
        %s1634 = sand.u32 %s405, 1
        %s1635 = smul.addr %s1634, 8
        %s1636 = scalar_lea.vmem [#allocation17], %s1635
        // Predicated region
        $region121: #{tpu_custom_call.1} parent=83 // pred_check
          %p1637 = pneg %p415
        $region122: #{tpu_custom_call.1} parent=83 // pred_check_branch
          %1639 = sbr.rel (%p1637) target = $region124
        $region123: #{tpu_custom_call.1} parent=83 // pred_region
          %1641 = vsyncadd %s1633, 0
          %s1642 = sadd.s32 %s42, %s41
          %s1643 = smul.addr %s1642, 8
          %s1644 = scalar_lea.hbm %s16, %s1643
          %s1646 = sshll.u32 %s1636, 4
          %s1647 = int_to_ptr.vmem [resolvable:$true] %s1646
          %s1648 = sshll.u32 %s1644, 4
          %s1649 = int_to_ptr.hbm [resolvable:$true] %s1648
          %1651 = dma.vmem_to_hbm [thread:$0]  %s1647, 128, %s1649, %s1633
        $region124: #{tpu_custom_call.1} parent=83 // pred_fallthru
          _
      $region84: #{tpu_custom_call.1} parent=5 // pred_fallthru
        _
      %p1652 = scmp.le.s32.totalorder 2, %s32
      // Predicated region
      $region125: #{tpu_custom_call.1} parent=5 // pred_check
        %p1653 = pneg %p1652
      $region126: #{tpu_custom_call.1} parent=5 // pred_check_branch
        %1655 = sbr.rel (%p1653) target = $region128
      $region127: #{tpu_custom_call.1} parent=5 // pred_region
        %s1656 = ssub.s32 %s32, 2
        // Predicated region
        $region129: #{tpu_custom_call.1} parent=127 // pred_check
          %p1657 = pneg %p421
        $region130: #{tpu_custom_call.1} parent=127 // pred_check_branch
          %1659 = sbr.rel (%p1657) target = $region132
        $region131: #{tpu_custom_call.1} parent=127 // pred_region
          %s1660 = sand.u32 %s406, 1
          %s1661 = scalar_lea.sflag [#allocation5], %s1660
          %s1662 = sand.u32 %s406, 1
          %s1663 = smul.addr %s1662, 8
          %s1664 = scalar_lea.vmem [#allocation17], %s1663
          %1666 = dma.done %s1661, 128
        $region132: #{tpu_custom_call.1} parent=127 // pred_fallthru
          _
      $region128: #{tpu_custom_call.1} parent=5 // pred_fallthru
        _
    $region6: #{tpu_custom_call.1} parent=1 // loop_footer
      %s36 = sadd.s32 1, %s32
    $region7: #{tpu_custom_call.1} parent=1 // loop_footer_branch
      %31 = sbr.rel target = $region3
    $region8: #{tpu_custom_call.1} parent=1 // loop_exit
      _
    %1667 = vsyncpa [#allocation4], 1
    %s1668 = scalar_lea.sflag [#allocation4], 1
    %1669 = vsyncpa %s1668, 1
    %1670 = vsyncpa [#allocation7], 1
    %1671 = vsyncpa [#allocation10], 1
    %1672 = vsyncpa [#allocation13], 1
    %1673 = vsyncpa [#allocation16], 1
    %1674 = vsyncpa [#allocation5], 1
    %s1675 = scalar_lea.sflag [#allocation5], 1
    %1676 = vsyncpa %s1675, 1

</llo_original>
